<compile_context>
chip_gen: v5e
topology: v5e:2x2
jax: 0.10.0
libtpu: 0.0.40
codegen_flags: <defaults>
</compile_context>

<pallas_src>
import functools

import jax
import jax.numpy as jnp
from jax.experimental import pallas as pl
from jax.experimental.pallas import tpu as pltpu


def _transformer_kernel(x_ref, w_in_ref, b_in_ref, w_out_ref, b_out_ref,
                        w1_ref, b1_ref, w2_ref, b2_ref, o_ref,
                        *, num_heads, pack):
    """One batch element per grid step; module-native (E, L) layout throughout."""
    _, E, L = x_ref.shape
    H = num_heads
    hd = E // H

    x_el = x_ref[0]                                             # (E, L)

    # Fused QKV projection, transposed form: (3E, E) @ (E, L) -> (3E, L).
    # The 1/sqrt(hd) attention scale is pre-folded into the Q rows of w_in/b_in.
    qkvT = jnp.dot(w_in_ref[...], x_el,
                   preferred_element_type=jnp.float32) + b_in_ref[...]

    # K needs queries-along-lanes orientation once; single (E, L)->(L, E) transpose.
    k_full = qkvT[E:2 * E, :].T                                 # (L, E)

    # Per-head attention on tile-aligned sublane slabs (offsets multiples of 8);
    # heads statically unrolled; softmax normalizes over the key axis (axis 0).
    ctx_t = []
    for h in range(H):
        qT = qkvT[h * hd:(h + 1) * hd, :]                       # (hd, L)  aligned slab
        vT = qkvT[2 * E + h * hd:2 * E + (h + 1) * hd, :]       # (hd, L)  aligned slab
        k_h = k_full[:, h * hd:(h + 1) * hd]                    # (L, hd)
        # S^T[m, l] = sum_d K[m, d] * Q_scaled[l, d]
        sT = jnp.dot(k_h, qT, preferred_element_type=jnp.float32)   # (L, L)
        m = jnp.max(sT, axis=0, keepdims=True)
        p = jnp.exp(sT - m)
        pT = p / jnp.sum(p, axis=0, keepdims=True)              # exact softmax
        # C_h^T[d, l] = sum_m V[m, d] * P[l, m]
        ctx_t.append(jnp.dot(vT, pT, preferred_element_type=jnp.float32))  # (hd, L)
    ctxT = jnp.concatenate(ctx_t, axis=0)                       # (E, L) sublane stack

    # Output projection, transposed: attn^T = W_out @ C^T + b_out
    attnT = jnp.dot(w_out_ref[...], ctxT,
                    preferred_element_type=jnp.float32) + b_out_ref[...]

    # Residual + LayerNorm over the whole (E, L) plane (eps=1e-6, no affine),
    # two-pass variance for numerical safety.
    y = x_el.astype(jnp.float32) + attnT
    mu = jnp.mean(y)
    d = y - mu
    y = d * jax.lax.rsqrt(jnp.mean(d * d) + 1e-6)

    # Feed-forward on the last (L == embed_size) axis — already module layout.
    hdn = jnp.dot(y, w1_ref[...], preferred_element_type=jnp.float32) + b1_ref[...]
    hdn = jnp.maximum(hdn, 0.0)
    f = jnp.dot(hdn, w2_ref[...], preferred_element_type=jnp.float32) + b2_ref[...]

    z = y + f
    mu2 = jnp.mean(z)
    d2 = z - mu2
    z = d2 * jax.lax.rsqrt(jnp.mean(d2 * d2) + 1e-6)

    # Lane-dense store: pack `pack` aligned row-slabs side-by-side so the
    # stored block's last dim is a multiple of 128 (full unmasked vregs).
    if pack > 1:
        rows = E // pack
        z = jnp.concatenate([z[i * rows:(i + 1) * rows, :] for i in range(pack)],
                            axis=-1)
    o_ref[...] = z[None].astype(o_ref.dtype)


def prepare_params(params, num_heads):
    """One-time weight fusion / layout prep (hoisted out of the per-call path)."""
    E = params["out_w"].shape[0]
    hd = E // num_heads
    scale = 1.0 / (hd ** 0.5)
    # Fold the attention scale into the Q rows of the fused in-projection.
    q_scale = jnp.concatenate([jnp.full((E,), scale, params["in_w"].dtype),
                               jnp.ones((2 * E,), params["in_w"].dtype)])
    return {
        "w_in": params["in_w"] * q_scale[:, None],      # (3E, E) rows [Wq;Wk;Wv]
        "b_in": (params["in_b"] * q_scale)[:, None],    # (3E, 1) column bias
        "w_out": params["out_w"],                       # (E, E)
        "b_out": params["out_b"][:, None],              # (E, 1)
        "w1t": params["w1"].T,                          # (L, FF)
        "b1": params["b1"][None, :],                    # (1, FF)
        "w2t": params["w2"].T,                          # (FF, L)
        "b2": params["b2"][None, :],                    # (1, L)
    }


def swapped_transformer_layer(x, prepared, num_heads):
    B, E, L = x.shape
    assert L == E, "original module requires seq_len == embed_size for x + ff(x)"
    assert E % num_heads == 0
    ff = prepared["w1t"].shape[1]

    # Lane-dense output packing factor (pack row-slabs so last dim % 128 == 0).
    if L % 128 == 0:
        pack = 1                      # already lane dense at realistic sizes
    elif 128 % L == 0 and E % (128 // L) == 0:
        pack = 128 // L
    else:
        pack = 1                      # TODO(synk): pad L to a lane multiple here
    rows = E // pack

    kernel = functools.partial(_transformer_kernel, num_heads=num_heads, pack=pack)

    out = pl.pallas_call(
        kernel,
        grid=(B,),
        in_specs=[
            pl.BlockSpec((1, E, L), lambda b: (b, 0, 0)),
            pl.BlockSpec((3 * E, E), lambda b: (0, 0)),
            pl.BlockSpec((3 * E, 1), lambda b: (0, 0)),
            pl.BlockSpec((E, E), lambda b: (0, 0)),
            pl.BlockSpec((E, 1), lambda b: (0, 0)),
            pl.BlockSpec((L, ff), lambda b: (0, 0)),
            pl.BlockSpec((1, ff), lambda b: (0, 0)),
            pl.BlockSpec((ff, L), lambda b: (0, 0)),
            pl.BlockSpec((1, L), lambda b: (0, 0)),
        ],
        out_specs=pl.BlockSpec((1, rows, pack * L), lambda b: (b, 0, 0)),
        out_shape=jax.ShapeDtypeStruct((B, rows, pack * L), x.dtype),
        compiler_params=pltpu.CompilerParams(
            dimension_semantics=("parallel",),
            vmem_limit_bytes=32 * 1024 * 1024),
    )(x, prepared["w_in"], prepared["b_in"], prepared["w_out"], prepared["b_out"],
      prepared["w1t"], prepared["b1"], prepared["w2t"], prepared["b2"])

    if pack > 1:
        # Undo the in-kernel slab packing (cheap XLA-side layout plumbing).
        out = out.reshape(B, rows, pack, L).transpose(0, 2, 1, 3)
    return out.reshape(B, E, L)


def ref_forward(x, p, num_heads):
    """Pure-JAX reference matching the PyTorch forward (eval mode)."""
    B, E, L = x.shape
    hd = E // num_heads
    xt = jnp.swapaxes(x, 1, 2)                                      # (B, L, E)
    qkv = xt @ p["in_w"].T + p["in_b"]                              # (B, L, 3E)
    q, k, v = jnp.split(qkv, 3, axis=-1)

    def heads(t):
        return t.reshape(B, L, num_heads, hd).transpose(0, 2, 1, 3)

    qh, kh, vh = heads(q), heads(k), heads(v)
    s = jnp.einsum("bhld,bhmd->bhlm", qh, kh) / jnp.sqrt(hd)
    a = jax.nn.softmax(s, axis=-1)
    ctx = jnp.einsum("bhlm,bhmd->bhld", a, vh).transpose(0, 2, 1, 3).reshape(B, L, E)
    attn_out = ctx @ p["out_w"].T + p["out_b"]
    y = x + jnp.swapaxes(attn_out, 1, 2)

    def ln(t):
        mu = jnp.mean(t, axis=(1, 2), keepdims=True)
        var = jnp.mean((t - mu) ** 2, axis=(1, 2), keepdims=True)
        return (t - mu) / jnp.sqrt(var + 1e-6)

    y = ln(y)
    h = jax.nn.relu(y @ p["w1"].T + p["b1"])
    f = h @ p["w2"].T + p["b2"]
    return ln(y + f)


if __name__ == "__main__":
    embed_size = 32
    num_heads = 4
    ff_size = 64
    seq_len = embed_size      # required by the original module's ff residual
    batch = 2

    key = jax.random.PRNGKey(0)
    ks = jax.random.split(key, 10)
    s = 0.05
    params = {
        "in_w":  s * jax.random.normal(ks[0], (3 * embed_size, embed_size), jnp.float32),
        "in_b":  s * jax.random.normal(ks[1], (3 * embed_size,), jnp.float32),
        "out_w": s * jax.random.normal(ks[2], (embed_size, embed_size), jnp.float32),
        "out_b": s * jax.random.normal(ks[3], (embed_size,), jnp.float32),
        "w1":    s * jax.random.normal(ks[4], (ff_size, embed_size), jnp.float32),
        "b1":    s * jax.random.normal(ks[5], (ff_size,), jnp.float32),
        "w2":    s * jax.random.normal(ks[6], (embed_size, ff_size), jnp.float32),
        "b2":    s * jax.random.normal(ks[7], (embed_size,), jnp.float32),
    }
    x = jax.random.normal(ks[8], (batch, embed_size, seq_len), jnp.float32)

    prepared = prepare_params(params, num_heads)    # one-time weight prep
    out = jax.block_until_ready(swapped_transformer_layer(x, prepared, num_heads))
    ref = jax.block_until_ready(ref_forward(x, params, num_heads))

    assert out.shape == ref.shape
    max_err = jnp.max(jnp.abs(out - ref))
    assert jnp.allclose(out, ref, rtol=1e-3, atol=1e-3), f"max abs err {max_err}"

    print("KERNEL_OK")
</pallas_src>

<mosaic_0001>
module attributes {stable_mosaic.version = 11 : i64} {
  func.func @_transformer_kernel(%arg0: i32, %arg1: memref<1x32x32xf32, #tpu.memory_space<vmem>>, %arg2: memref<96x32xf32, #tpu.memory_space<vmem>>, %arg3: memref<96x1xf32, #tpu.memory_space<vmem>>, %arg4: memref<32x32xf32, #tpu.memory_space<vmem>>, %arg5: memref<32x1xf32, #tpu.memory_space<vmem>>, %arg6: memref<32x64xf32, #tpu.memory_space<vmem>>, %arg7: memref<1x64xf32, #tpu.memory_space<vmem>>, %arg8: memref<64x32xf32, #tpu.memory_space<vmem>>, %arg9: memref<1x32xf32, #tpu.memory_space<vmem>>, %arg10: memref<1x8x128xf32, #tpu.memory_space<vmem>>) attributes {dimension_semantics = [#tpu.dimension_semantics<parallel>], iteration_bounds = array<i64: 2>, scalar_prefetch = 0 : i64, scratch_operands = 0 : i64, tpu.core_type = #tpu.core_type<tc>, window_params = [{transform_indices = @transform_0, window_bounds = array<i64: 1, 32, 32>}, {pipeline_mode = #tpu.pipeline_mode<synchronous>, transform_indices = @transform_1, window_bounds = array<i64: 96, 32>}, {pipeline_mode = #tpu.pipeline_mode<synchronous>, transform_indices = @transform_2, window_bounds = array<i64: 96, 1>}, {pipeline_mode = #tpu.pipeline_mode<synchronous>, transform_indices = @transform_3, window_bounds = array<i64: 32, 32>}, {pipeline_mode = #tpu.pipeline_mode<synchronous>, transform_indices = @transform_4, window_bounds = array<i64: 32, 1>}, {pipeline_mode = #tpu.pipeline_mode<synchronous>, transform_indices = @transform_5, window_bounds = array<i64: 32, 64>}, {pipeline_mode = #tpu.pipeline_mode<synchronous>, transform_indices = @transform_6, window_bounds = array<i64: 1, 64>}, {pipeline_mode = #tpu.pipeline_mode<synchronous>, transform_indices = @transform_7, window_bounds = array<i64: 64, 32>}, {pipeline_mode = #tpu.pipeline_mode<synchronous>, transform_indices = @transform_8, window_bounds = array<i64: 1, 32>}, {transform_indices = @transform_9, window_bounds = array<i64: 1, 8, 128>}]} {
    %c0 = arith.constant 0 : index
    %c0_0 = arith.constant 0 : index
    %c0_1 = arith.constant 0 : index
    %0 = vector.load %arg1[%c0, %c0_0, %c0_1] : memref<1x32x32xf32, #tpu.memory_space<vmem>>, vector<1x32x32xf32>
    %1 = vector.shape_cast %0 : vector<1x32x32xf32> to vector<32x32xf32>
    %c0_2 = arith.constant 0 : index
    %c0_3 = arith.constant 0 : index
    %2 = vector.load %arg2[%c0_2, %c0_3] : memref<96x32xf32, #tpu.memory_space<vmem>>, vector<96x32xf32>
    %cst = arith.constant dense<0.000000e+00> : vector<96x32xf32>
    %3 = tpu.matmul %2, %1, %cst {dimension_numbers = #tpu.dot_dimension_numbers<[1], [0], [0], [1], [0, 0, 1, 1], [], []>} : vector<96x32xf32>, vector<32x32xf32>, vector<96x32xf32> -> vector<96x32xf32>
    %c0_4 = arith.constant 0 : index
    %c0_5 = arith.constant 0 : index
    %4 = vector.load %arg3[%c0_4, %c0_5] : memref<96x1xf32, #tpu.memory_space<vmem>>, vector<96x1xf32>
    %5 = vector.broadcast %4 : vector<96x1xf32> to vector<96x32xf32>
    %6 = arith.addf %3, %5 : vector<96x32xf32>
    %7 = vector.extract_strided_slice %6 {offsets = [32, 0], sizes = [32, 32], strides = [1, 1]} : vector<96x32xf32> to vector<32x32xf32>
    %8 = tpu.transpose %7, [1, 0] : vector<32x32xf32> -> vector<32x32xf32>
    %9 = vector.extract_strided_slice %6 {offsets = [0, 0], sizes = [8, 32], strides = [1, 1]} : vector<96x32xf32> to vector<8x32xf32>
    %10 = vector.extract_strided_slice %6 {offsets = [64, 0], sizes = [8, 32], strides = [1, 1]} : vector<96x32xf32> to vector<8x32xf32>
    %11 = vector.extract_strided_slice %8 {offsets = [0, 0], sizes = [32, 8], strides = [1, 1]} : vector<32x32xf32> to vector<32x8xf32>
    %cst_6 = arith.constant dense<0.000000e+00> : vector<32x32xf32>
    %12 = tpu.matmul %11, %9, %cst_6 {dimension_numbers = #tpu.dot_dimension_numbers<[1], [0], [0], [1], [0, 0, 1, 1], [], []>} : vector<32x8xf32>, vector<8x32xf32>, vector<32x32xf32> -> vector<32x32xf32>
    %cst_7 = arith.constant dense<0xFF800000> : vector<32xf32>
    %13 = vector.multi_reduction <maximumf>, %12, %cst_7 [0] : vector<32x32xf32> to vector<32xf32>
    %14 = vector.shape_cast %13 : vector<32xf32> to vector<1x32xf32>
    %15 = vector.broadcast %14 : vector<1x32xf32> to vector<32x32xf32>
    %16 = arith.subf %12, %15 : vector<32x32xf32>
    %17 = math.exp %16 : vector<32x32xf32>
    %cst_8 = arith.constant dense<0.000000e+00> : vector<32xf32>
    %18 = vector.multi_reduction <add>, %17, %cst_8 [0] : vector<32x32xf32> to vector<32xf32>
    %19 = vector.shape_cast %18 : vector<32xf32> to vector<1x32xf32>
    %20 = vector.broadcast %19 : vector<1x32xf32> to vector<32x32xf32>
    %21 = arith.divf %17, %20 : vector<32x32xf32>
    %cst_9 = arith.constant dense<0.000000e+00> : vector<8x32xf32>
    %22 = tpu.matmul %10, %21, %cst_9 {dimension_numbers = #tpu.dot_dimension_numbers<[1], [0], [0], [1], [0, 0, 1, 1], [], []>} : vector<8x32xf32>, vector<32x32xf32>, vector<8x32xf32> -> vector<8x32xf32>
    %23 = vector.extract_strided_slice %6 {offsets = [8, 0], sizes = [8, 32], strides = [1, 1]} : vector<96x32xf32> to vector<8x32xf32>
    %24 = vector.extract_strided_slice %6 {offsets = [72, 0], sizes = [8, 32], strides = [1, 1]} : vector<96x32xf32> to vector<8x32xf32>
    %25 = vector.extract_strided_slice %8 {offsets = [0, 8], sizes = [32, 8], strides = [1, 1]} : vector<32x32xf32> to vector<32x8xf32>
    %cst_10 = arith.constant dense<0.000000e+00> : vector<32x32xf32>
    %26 = tpu.matmul %25, %23, %cst_10 {dimension_numbers = #tpu.dot_dimension_numbers<[1], [0], [0], [1], [0, 0, 1, 1], [], []>} : vector<32x8xf32>, vector<8x32xf32>, vector<32x32xf32> -> vector<32x32xf32>
    %cst_11 = arith.constant dense<0xFF800000> : vector<32xf32>
    %27 = vector.multi_reduction <maximumf>, %26, %cst_11 [0] : vector<32x32xf32> to vector<32xf32>
    %28 = vector.shape_cast %27 : vector<32xf32> to vector<1x32xf32>
    %29 = vector.broadcast %28 : vector<1x32xf32> to vector<32x32xf32>
    %30 = arith.subf %26, %29 : vector<32x32xf32>
    %31 = math.exp %30 : vector<32x32xf32>
    %cst_12 = arith.constant dense<0.000000e+00> : vector<32xf32>
    %32 = vector.multi_reduction <add>, %31, %cst_12 [0] : vector<32x32xf32> to vector<32xf32>
    %33 = vector.shape_cast %32 : vector<32xf32> to vector<1x32xf32>
    %34 = vector.broadcast %33 : vector<1x32xf32> to vector<32x32xf32>
    %35 = arith.divf %31, %34 : vector<32x32xf32>
    %cst_13 = arith.constant dense<0.000000e+00> : vector<8x32xf32>
    %36 = tpu.matmul %24, %35, %cst_13 {dimension_numbers = #tpu.dot_dimension_numbers<[1], [0], [0], [1], [0, 0, 1, 1], [], []>} : vector<8x32xf32>, vector<32x32xf32>, vector<8x32xf32> -> vector<8x32xf32>
    %37 = vector.extract_strided_slice %6 {offsets = [16, 0], sizes = [8, 32], strides = [1, 1]} : vector<96x32xf32> to vector<8x32xf32>
    %38 = vector.extract_strided_slice %6 {offsets = [80, 0], sizes = [8, 32], strides = [1, 1]} : vector<96x32xf32> to vector<8x32xf32>
    %39 = vector.extract_strided_slice %8 {offsets = [0, 16], sizes = [32, 8], strides = [1, 1]} : vector<32x32xf32> to vector<32x8xf32>
    %cst_14 = arith.constant dense<0.000000e+00> : vector<32x32xf32>
    %40 = tpu.matmul %39, %37, %cst_14 {dimension_numbers = #tpu.dot_dimension_numbers<[1], [0], [0], [1], [0, 0, 1, 1], [], []>} : vector<32x8xf32>, vector<8x32xf32>, vector<32x32xf32> -> vector<32x32xf32>
    %cst_15 = arith.constant dense<0xFF800000> : vector<32xf32>
    %41 = vector.multi_reduction <maximumf>, %40, %cst_15 [0] : vector<32x32xf32> to vector<32xf32>
    %42 = vector.shape_cast %41 : vector<32xf32> to vector<1x32xf32>
    %43 = vector.broadcast %42 : vector<1x32xf32> to vector<32x32xf32>
    %44 = arith.subf %40, %43 : vector<32x32xf32>
    %45 = math.exp %44 : vector<32x32xf32>
    %cst_16 = arith.constant dense<0.000000e+00> : vector<32xf32>
    %46 = vector.multi_reduction <add>, %45, %cst_16 [0] : vector<32x32xf32> to vector<32xf32>
    %47 = vector.shape_cast %46 : vector<32xf32> to vector<1x32xf32>
    %48 = vector.broadcast %47 : vector<1x32xf32> to vector<32x32xf32>
    %49 = arith.divf %45, %48 : vector<32x32xf32>
    %cst_17 = arith.constant dense<0.000000e+00> : vector<8x32xf32>
    %50 = tpu.matmul %38, %49, %cst_17 {dimension_numbers = #tpu.dot_dimension_numbers<[1], [0], [0], [1], [0, 0, 1, 1], [], []>} : vector<8x32xf32>, vector<32x32xf32>, vector<8x32xf32> -> vector<8x32xf32>
    %51 = vector.extract_strided_slice %6 {offsets = [24, 0], sizes = [8, 32], strides = [1, 1]} : vector<96x32xf32> to vector<8x32xf32>
    %52 = vector.extract_strided_slice %6 {offsets = [88, 0], sizes = [8, 32], strides = [1, 1]} : vector<96x32xf32> to vector<8x32xf32>
    %53 = vector.extract_strided_slice %8 {offsets = [0, 24], sizes = [32, 8], strides = [1, 1]} : vector<32x32xf32> to vector<32x8xf32>
    %cst_18 = arith.constant dense<0.000000e+00> : vector<32x32xf32>
    %54 = tpu.matmul %53, %51, %cst_18 {dimension_numbers = #tpu.dot_dimension_numbers<[1], [0], [0], [1], [0, 0, 1, 1], [], []>} : vector<32x8xf32>, vector<8x32xf32>, vector<32x32xf32> -> vector<32x32xf32>
    %cst_19 = arith.constant dense<0xFF800000> : vector<32xf32>
    %55 = vector.multi_reduction <maximumf>, %54, %cst_19 [0] : vector<32x32xf32> to vector<32xf32>
    %56 = vector.shape_cast %55 : vector<32xf32> to vector<1x32xf32>
    %57 = vector.broadcast %56 : vector<1x32xf32> to vector<32x32xf32>
    %58 = arith.subf %54, %57 : vector<32x32xf32>
    %59 = math.exp %58 : vector<32x32xf32>
    %cst_20 = arith.constant dense<0.000000e+00> : vector<32xf32>
    %60 = vector.multi_reduction <add>, %59, %cst_20 [0] : vector<32x32xf32> to vector<32xf32>
    %61 = vector.shape_cast %60 : vector<32xf32> to vector<1x32xf32>
    %62 = vector.broadcast %61 : vector<1x32xf32> to vector<32x32xf32>
    %63 = arith.divf %59, %62 : vector<32x32xf32>
    %cst_21 = arith.constant dense<0.000000e+00> : vector<8x32xf32>
    %64 = tpu.matmul %52, %63, %cst_21 {dimension_numbers = #tpu.dot_dimension_numbers<[1], [0], [0], [1], [0, 0, 1, 1], [], []>} : vector<8x32xf32>, vector<32x32xf32>, vector<8x32xf32> -> vector<8x32xf32>
    %65 = tpu.concatenate %22, %36, %50, %64 in 0 : vector<8x32xf32>, vector<8x32xf32>, vector<8x32xf32>, vector<8x32xf32> -> vector<32x32xf32>
    %c0_22 = arith.constant 0 : index
    %c0_23 = arith.constant 0 : index
    %66 = vector.load %arg4[%c0_22, %c0_23] : memref<32x32xf32, #tpu.memory_space<vmem>>, vector<32x32xf32>
    %cst_24 = arith.constant dense<0.000000e+00> : vector<32x32xf32>
    %67 = tpu.matmul %66, %65, %cst_24 {dimension_numbers = #tpu.dot_dimension_numbers<[1], [0], [0], [1], [0, 0, 1, 1], [], []>} : vector<32x32xf32>, vector<32x32xf32>, vector<32x32xf32> -> vector<32x32xf32>
    %c0_25 = arith.constant 0 : index
    %c0_26 = arith.constant 0 : index
    %68 = vector.load %arg5[%c0_25, %c0_26] : memref<32x1xf32, #tpu.memory_space<vmem>>, vector<32x1xf32>
    %69 = vector.broadcast %68 : vector<32x1xf32> to vector<32x32xf32>
    %70 = arith.addf %67, %69 : vector<32x32xf32>
    %71 = arith.addf %1, %70 : vector<32x32xf32>
    %72 = vector.shape_cast %71 : vector<32x32xf32> to vector<1x32x32xf32>
    %cst_27 = arith.constant dense<0.000000e+00> : vector<1xf32>
    %73 = vector.multi_reduction <add>, %72, %cst_27 [1, 2] : vector<1x32x32xf32> to vector<1xf32>
    %74 = vector.shape_cast %73 : vector<1xf32> to vector<1x1x1xf32>
    %75 = vector.extract %74[0, 0, 0] : f32 from vector<1x1x1xf32>
    %cst_28 = arith.constant 1.024000e+03 : f32
    %76 = arith.divf %75, %cst_28 : f32
    %77 = vector.broadcast %76 : f32 to vector<32x32xf32>
    %78 = arith.subf %71, %77 : vector<32x32xf32>
    %79 = arith.mulf %78, %78 : vector<32x32xf32>
    %80 = vector.shape_cast %79 : vector<32x32xf32> to vector<1x32x32xf32>
    %cst_29 = arith.constant dense<0.000000e+00> : vector<1xf32>
    %81 = vector.multi_reduction <add>, %80, %cst_29 [1, 2] : vector<1x32x32xf32> to vector<1xf32>
    %82 = vector.shape_cast %81 : vector<1xf32> to vector<1x1x1xf32>
    %83 = vector.extract %82[0, 0, 0] : f32 from vector<1x1x1xf32>
    %cst_30 = arith.constant 1.024000e+03 : f32
    %84 = arith.divf %83, %cst_30 : f32
    %cst_31 = arith.constant 9.99999997E-7 : f32
    %85 = arith.addf %84, %cst_31 : f32
    %86 = math.rsqrt %85 : f32
    %87 = vector.broadcast %86 : f32 to vector<32x32xf32>
    %88 = arith.mulf %78, %87 : vector<32x32xf32>
    %c0_32 = arith.constant 0 : index
    %c0_33 = arith.constant 0 : index
    %89 = vector.load %arg6[%c0_32, %c0_33] : memref<32x64xf32, #tpu.memory_space<vmem>>, vector<32x64xf32>
    %cst_34 = arith.constant dense<0.000000e+00> : vector<32x64xf32>
    %90 = tpu.matmul %88, %89, %cst_34 {dimension_numbers = #tpu.dot_dimension_numbers<[1], [0], [0], [1], [0, 0, 1, 1], [], []>} : vector<32x32xf32>, vector<32x64xf32>, vector<32x64xf32> -> vector<32x64xf32>
    %c0_35 = arith.constant 0 : index
    %c0_36 = arith.constant 0 : index
    %91 = vector.load %arg7[%c0_35, %c0_36] : memref<1x64xf32, #tpu.memory_space<vmem>>, vector<1x64xf32>
    %92 = vector.broadcast %91 : vector<1x64xf32> to vector<32x64xf32>
    %93 = arith.addf %90, %92 : vector<32x64xf32>
    %cst_37 = arith.constant 0.000000e+00 : f32
    %94 = vector.broadcast %cst_37 : f32 to vector<32x64xf32>
    %95 = arith.maximumf %93, %94 : vector<32x64xf32>
    %c0_38 = arith.constant 0 : index
    %c0_39 = arith.constant 0 : index
    %96 = vector.load %arg8[%c0_38, %c0_39] : memref<64x32xf32, #tpu.memory_space<vmem>>, vector<64x32xf32>
    %cst_40 = arith.constant dense<0.000000e+00> : vector<32x32xf32>
    %97 = tpu.matmul %95, %96, %cst_40 {dimension_numbers = #tpu.dot_dimension_numbers<[1], [0], [0], [1], [0, 0, 1, 1], [], []>} : vector<32x64xf32>, vector<64x32xf32>, vector<32x32xf32> -> vector<32x32xf32>
    %c0_41 = arith.constant 0 : index
    %c0_42 = arith.constant 0 : index
    %98 = vector.load %arg9[%c0_41, %c0_42] : memref<1x32xf32, #tpu.memory_space<vmem>>, vector<1x32xf32>
    %99 = vector.broadcast %98 : vector<1x32xf32> to vector<32x32xf32>
    %100 = arith.addf %97, %99 : vector<32x32xf32>
    %101 = arith.addf %88, %100 : vector<32x32xf32>
    %102 = vector.shape_cast %101 : vector<32x32xf32> to vector<1x32x32xf32>
    %cst_43 = arith.constant dense<0.000000e+00> : vector<1xf32>
    %103 = vector.multi_reduction <add>, %102, %cst_43 [1, 2] : vector<1x32x32xf32> to vector<1xf32>
    %104 = vector.shape_cast %103 : vector<1xf32> to vector<1x1x1xf32>
    %105 = vector.extract %104[0, 0, 0] : f32 from vector<1x1x1xf32>
    %cst_44 = arith.constant 1.024000e+03 : f32
    %106 = arith.divf %105, %cst_44 : f32
    %107 = vector.broadcast %106 : f32 to vector<32x32xf32>
    %108 = arith.subf %101, %107 : vector<32x32xf32>
    %109 = arith.mulf %108, %108 : vector<32x32xf32>
    %110 = vector.shape_cast %109 : vector<32x32xf32> to vector<1x32x32xf32>
    %cst_45 = arith.constant dense<0.000000e+00> : vector<1xf32>
    %111 = vector.multi_reduction <add>, %110, %cst_45 [1, 2] : vector<1x32x32xf32> to vector<1xf32>
    %112 = vector.shape_cast %111 : vector<1xf32> to vector<1x1x1xf32>
    %113 = vector.extract %112[0, 0, 0] : f32 from vector<1x1x1xf32>
    %cst_46 = arith.constant 1.024000e+03 : f32
    %114 = arith.divf %113, %cst_46 : f32
    %cst_47 = arith.constant 9.99999997E-7 : f32
    %115 = arith.addf %114, %cst_47 : f32
    %116 = math.rsqrt %115 : f32
    %117 = vector.broadcast %116 : f32 to vector<32x32xf32>
    %118 = arith.mulf %108, %117 : vector<32x32xf32>
    %119 = vector.extract_strided_slice %118 {offsets = [0, 0], sizes = [8, 32], strides = [1, 1]} : vector<32x32xf32> to vector<8x32xf32>
    %120 = vector.extract_strided_slice %118 {offsets = [8, 0], sizes = [8, 32], strides = [1, 1]} : vector<32x32xf32> to vector<8x32xf32>
    %121 = vector.extract_strided_slice %118 {offsets = [16, 0], sizes = [8, 32], strides = [1, 1]} : vector<32x32xf32> to vector<8x32xf32>
    %122 = vector.extract_strided_slice %118 {offsets = [24, 0], sizes = [8, 32], strides = [1, 1]} : vector<32x32xf32> to vector<8x32xf32>
    %123 = tpu.concatenate %119, %120, %121, %122 in 1 : vector<8x32xf32>, vector<8x32xf32>, vector<8x32xf32>, vector<8x32xf32> -> vector<8x128xf32>
    %124 = vector.shape_cast %123 : vector<8x128xf32> to vector<1x8x128xf32>
    %c0_48 = arith.constant 0 : index
    %c0_49 = arith.constant 0 : index
    %c0_50 = arith.constant 0 : index
    %125 = vector.load %arg10[%c0_48, %c0_49, %c0_50] : memref<1x8x128xf32, #tpu.memory_space<vmem>>, vector<1x8x128xf32>
    tpu.vector_store %arg10[%c0_48, %c0_49, %c0_50], %124 {strides = array<i32>} : memref<1x8x128xf32, #tpu.memory_space<vmem>>, vector<1x8x128xf32>,
    return
  }
  func.func @transform_0(%arg0: i32) -> (i32, i32, i32) {
    %c0_i32 = arith.constant 0 : i32
    %c0_i32_0 = arith.constant 0 : i32
    %c0_i32_1 = arith.constant 0 : i32
    return %arg0, %c0_i32, %c0_i32_0 : i32, i32, i32
  }
  func.func @transform_1(%arg0: i32) -> (i32, i32) {
    %c0_i32 = arith.constant 0 : i32
    %c0_i32_0 = arith.constant 0 : i32
    %c0_i32_1 = arith.constant 0 : i32
    return %c0_i32, %c0_i32_0 : i32, i32
  }
  func.func @transform_2(%arg0: i32) -> (i32, i32) {
    %c0_i32 = arith.constant 0 : i32
    %c0_i32_0 = arith.constant 0 : i32
    %c0_i32_1 = arith.constant 0 : i32
    return %c0_i32, %c0_i32_0 : i32, i32
  }
  func.func @transform_3(%arg0: i32) -> (i32, i32) {
    %c0_i32 = arith.constant 0 : i32
    %c0_i32_0 = arith.constant 0 : i32
    %c0_i32_1 = arith.constant 0 : i32
    return %c0_i32, %c0_i32_0 : i32, i32
  }
  func.func @transform_4(%arg0: i32) -> (i32, i32) {
    %c0_i32 = arith.constant 0 : i32
    %c0_i32_0 = arith.constant 0 : i32
    %c0_i32_1 = arith.constant 0 : i32
    return %c0_i32, %c0_i32_0 : i32, i32
  }
  func.func @transform_5(%arg0: i32) -> (i32, i32) {
    %c0_i32 = arith.constant 0 : i32
    %c0_i32_0 = arith.constant 0 : i32
    %c0_i32_1 = arith.constant 0 : i32
    return %c0_i32, %c0_i32_0 : i32, i32
  }
  func.func @transform_6(%arg0: i32) -> (i32, i32) {
    %c0_i32 = arith.constant 0 : i32
    %c0_i32_0 = arith.constant 0 : i32
    %c0_i32_1 = arith.constant 0 : i32
    return %c0_i32, %c0_i32_0 : i32, i32
  }
  func.func @transform_7(%arg0: i32) -> (i32, i32) {
    %c0_i32 = arith.constant 0 : i32
    %c0_i32_0 = arith.constant 0 : i32
    %c0_i32_1 = arith.constant 0 : i32
    return %c0_i32, %c0_i32_0 : i32, i32
  }
  func.func @transform_8(%arg0: i32) -> (i32, i32) {
    %c0_i32 = arith.constant 0 : i32
    %c0_i32_0 = arith.constant 0 : i32
    %c0_i32_1 = arith.constant 0 : i32
    return %c0_i32, %c0_i32_0 : i32, i32
  }
  func.func @transform_9(%arg0: i32) -> (i32, i32, i32) {
    %c0_i32 = arith.constant 0 : i32
    %c0_i32_0 = arith.constant 0 : i32
    %c0_i32_1 = arith.constant 0 : i32
    return %arg0, %c0_i32, %c0_i32_0 : i32, i32, i32
  }
}

</mosaic_0001>

<llo_original>
// kernel: tpu_custom_call.1
$region0: #{tpu_custom_call.1}
  #allocation0 [shape = 'u32[]', space=smem, size = 0x4, offset = 0x4, fixed_abs, tag = 'smem constant byte address 0x4 - core index']
  #allocation1 [shape = 'u32[72,128]{1,0:T(1,128)}', space=vmem, size = 0x9000, scoped, tag = 'internal scratch']
  %s0 = inlined_call_operand.vmem [shape: f32[2,32,32], index: 0, kind: input, shape index: {}]
  %s1 = inlined_call_operand.vmem [shape: f32[96,32], index: 1, kind: input, shape index: {}]
  %s2 = inlined_call_operand.vmem [shape: f32[96,1], index: 2, kind: input, shape index: {}]
  %s3 = inlined_call_operand.vmem [shape: f32[32,32], index: 3, kind: input, shape index: {}]
  %s4 = inlined_call_operand.vmem [shape: f32[32,1], index: 4, kind: input, shape index: {}]
  %s5 = inlined_call_operand.vmem [shape: f32[32,64], index: 5, kind: input, shape index: {}]
  %s6 = inlined_call_operand.vmem [shape: f32[1,64], index: 6, kind: input, shape index: {}]
  %s7 = inlined_call_operand.vmem [shape: f32[64,32], index: 7, kind: input, shape index: {}]
  %s8 = inlined_call_operand.vmem [shape: f32[1,32], index: 8, kind: input, shape index: {}]
  %s9 = inlined_call_operand.hbm [shape: f32[2,8,128], index: 9, kind: output, shape index: {}]
  %s10 = sld [smem:[#allocation0]]
  $region69: #{tpu_custom_call.1} parent=0
    _
  %s12 = ssub.s32 1, %s10
  %s13 = scalar_select 0, %s12, %s10
  $region1: #{tpu_custom_call.1} parent=0
    #allocation2 [shape = 'u8[8192]{0}', space=vmem, size = 0x2000, scoped, tag = 'output window, operand 0']
    #allocation3 [shape = 's32[2]{0}', space=sflag, size = 0x8, scoped, tag = 'scoped memory for tpu_custom_call.1']
    %14 = vsyncpa [#allocation3], 0
    %s15 = scalar_lea.sflag [#allocation3], 1
    %16 = vsyncpa %s15, 0
    loop: start=0, step=1, limit=4
    $region2: #{tpu_custom_call.1} parent=1 // loop_pre_header
      _
    $region3: #{tpu_custom_call.1} parent=1 // loop_header
      %s18 = sphi 0, %s22
      %p19 = scmp.ge.s32.totalorder %s18, 4
      %s28 = sphi 0, %s30
      %s31 = sphi 0, %s28
      %s32 = sphi 0, %s31
      %s48 = sphi 0, %s32
      %s52 = sphi 0, %s52
      %s54 = sphi 0, %s52
      %s55 = sphi 0, %s54
      %s69 = sphi 0, %s55
      %s73 = sphi 0, %s73
      %s75 = sphi 0, %s73
      %s76 = sphi 0, %s75
      %s90 = sphi 0, %s76
      %s94 = sphi 0, %s94
      %s96 = sphi 0, %s94
      %s97 = sphi 0, %s96
      %s111 = sphi 0, %s97
      %s115 = sphi 0, %s115
      %s117 = sphi 0, %s115
      %s118 = sphi 0, %s117
      %s132 = sphi 0, %s118
      %s136 = sphi 0, %s136
      %s138 = sphi 0, %s136
      %s139 = sphi 0, %s138
      %s153 = sphi 0, %s139
      %s157 = sphi 0, %s157
      %s159 = sphi 0, %s157
      %s160 = sphi 0, %s159
      %s174 = sphi 0, %s160
      %s178 = sphi 0, %s178
      %s180 = sphi 0, %s178
      %s181 = sphi 0, %s180
      %s195 = sphi 0, %s181
      %s199 = sphi 0, %s199
      %s201 = sphi 0, %s199
      %s202 = sphi 0, %s201
      %s216 = sphi 0, %s202
      %s222 = sphi 0, %s224
      %s225 = sphi 0, %s222
      %s226 = sphi 0, %s225
      %s242 = sphi 0, %s226
    $region4: #{tpu_custom_call.1} parent=1 // loop_header_branch
      %21 = sbr.rel (%p19) target = $region8
    $region5: #{tpu_custom_call.1} parent=1 // loop_body
      %s23 = ssub.s32 %s18, 1
      %s24 = ssub.s32 %s18, 2
      %s25 = sadd.s32 %s18, 1
      %s26 = ssub.s32 %s18, %s25
      %p27 = scmp.eq.s32.totalorder %s26, 0
      %s29 = sadd.s32 %s28, 1
      %s30 = scalar_select %p27, %s28, %s29
      %p33 = pneg %p27
      %p34 = scmp.eq.s32.totalorder %s18, 1
      %p35 = por %p33, %p34
      %p36 = scmp.ne.s32.totalorder %s28, %s31
      %p37 = scmp.eq.s32.totalorder %s18, 0
      %p38 = por %p36, %p37
      %p39 = scmp.ne.s32.totalorder %s28, %s31
      %p40 = scmp.eq.s32.totalorder %s23, 1
      %p41 = por %p39, %p40
      %p42 = scmp.ne.s32.totalorder %s31, %s32
      %p43 = scmp.eq.s32.totalorder %s23, 0
      %p44 = por %p42, %p43
      %p45 = scmp.ne.s32.totalorder %s31, %s32
      %p46 = scmp.eq.s32.totalorder %s24, 1
      %p47 = por %p45, %p46
      %p49 = scmp.ne.s32.totalorder %s32, %s48
      %p50 = scmp.eq.s32.totalorder %s24, 0
      %p51 = por %p49, %p50
      %s53 = sadd.s32 %s52, 1
      %p56 = scmp.eq.s32.totalorder %s18, 1
      %p57 = scmp.ne.s32.totalorder %s52, %s54
      %p58 = scmp.eq.s32.totalorder %s18, 0
      %p59 = por %p57, %p58
      %p60 = scmp.ne.s32.totalorder %s52, %s54
      %p61 = scmp.eq.s32.totalorder %s23, 1
      %p62 = por %p60, %p61
      %p63 = scmp.ne.s32.totalorder %s54, %s55
      %p64 = scmp.eq.s32.totalorder %s23, 0
      %p65 = por %p63, %p64
      %p66 = scmp.ne.s32.totalorder %s54, %s55
      %p67 = scmp.eq.s32.totalorder %s24, 1
      %p68 = por %p66, %p67
      %p70 = scmp.ne.s32.totalorder %s55, %s69
      %p71 = scmp.eq.s32.totalorder %s24, 0
      %p72 = por %p70, %p71
      %s74 = sadd.s32 %s73, 1
      %p77 = scmp.eq.s32.totalorder %s18, 1
      %p78 = scmp.ne.s32.totalorder %s73, %s75
      %p79 = scmp.eq.s32.totalorder %s18, 0
      %p80 = por %p78, %p79
      %p81 = scmp.ne.s32.totalorder %s73, %s75
      %p82 = scmp.eq.s32.totalorder %s23, 1
      %p83 = por %p81, %p82
      %p84 = scmp.ne.s32.totalorder %s75, %s76
      %p85 = scmp.eq.s32.totalorder %s23, 0
      %p86 = por %p84, %p85
      %p87 = scmp.ne.s32.totalorder %s75, %s76
      %p88 = scmp.eq.s32.totalorder %s24, 1
      %p89 = por %p87, %p88
      %p91 = scmp.ne.s32.totalorder %s76, %s90
      %p92 = scmp.eq.s32.totalorder %s24, 0
      %p93 = por %p91, %p92
      %s95 = sadd.s32 %s94, 1
      %p98 = scmp.eq.s32.totalorder %s18, 1
      %p99 = scmp.ne.s32.totalorder %s94, %s96
      %p100 = scmp.eq.s32.totalorder %s18, 0
      %p101 = por %p99, %p100
      %p102 = scmp.ne.s32.totalorder %s94, %s96
      %p103 = scmp.eq.s32.totalorder %s23, 1
      %p104 = por %p102, %p103
      %p105 = scmp.ne.s32.totalorder %s96, %s97
      %p106 = scmp.eq.s32.totalorder %s23, 0
      %p107 = por %p105, %p106
      %p108 = scmp.ne.s32.totalorder %s96, %s97
      %p109 = scmp.eq.s32.totalorder %s24, 1
      %p110 = por %p108, %p109
      %p112 = scmp.ne.s32.totalorder %s97, %s111
      %p113 = scmp.eq.s32.totalorder %s24, 0
      %p114 = por %p112, %p113
      %s116 = sadd.s32 %s115, 1
      %p119 = scmp.eq.s32.totalorder %s18, 1
      %p120 = scmp.ne.s32.totalorder %s115, %s117
      %p121 = scmp.eq.s32.totalorder %s18, 0
      %p122 = por %p120, %p121
      %p123 = scmp.ne.s32.totalorder %s115, %s117
      %p124 = scmp.eq.s32.totalorder %s23, 1
      %p125 = por %p123, %p124
      %p126 = scmp.ne.s32.totalorder %s117, %s118
      %p127 = scmp.eq.s32.totalorder %s23, 0
      %p128 = por %p126, %p127
      %p129 = scmp.ne.s32.totalorder %s117, %s118
      %p130 = scmp.eq.s32.totalorder %s24, 1
      %p131 = por %p129, %p130
      %p133 = scmp.ne.s32.totalorder %s118, %s132
      %p134 = scmp.eq.s32.totalorder %s24, 0
      %p135 = por %p133, %p134
      %s137 = sadd.s32 %s136, 1
      %p140 = scmp.eq.s32.totalorder %s18, 1
      %p141 = scmp.ne.s32.totalorder %s136, %s138
      %p142 = scmp.eq.s32.totalorder %s18, 0
      %p143 = por %p141, %p142
      %p144 = scmp.ne.s32.totalorder %s136, %s138
      %p145 = scmp.eq.s32.totalorder %s23, 1
      %p146 = por %p144, %p145
      %p147 = scmp.ne.s32.totalorder %s138, %s139
      %p148 = scmp.eq.s32.totalorder %s23, 0
      %p149 = por %p147, %p148
      %p150 = scmp.ne.s32.totalorder %s138, %s139
      %p151 = scmp.eq.s32.totalorder %s24, 1
      %p152 = por %p150, %p151
      %p154 = scmp.ne.s32.totalorder %s139, %s153
      %p155 = scmp.eq.s32.totalorder %s24, 0
      %p156 = por %p154, %p155
      %s158 = sadd.s32 %s157, 1
      %p161 = scmp.eq.s32.totalorder %s18, 1
      %p162 = scmp.ne.s32.totalorder %s157, %s159
      %p163 = scmp.eq.s32.totalorder %s18, 0
      %p164 = por %p162, %p163
      %p165 = scmp.ne.s32.totalorder %s157, %s159
      %p166 = scmp.eq.s32.totalorder %s23, 1
      %p167 = por %p165, %p166
      %p168 = scmp.ne.s32.totalorder %s159, %s160
      %p169 = scmp.eq.s32.totalorder %s23, 0
      %p170 = por %p168, %p169
      %p171 = scmp.ne.s32.totalorder %s159, %s160
      %p172 = scmp.eq.s32.totalorder %s24, 1
      %p173 = por %p171, %p172
      %p175 = scmp.ne.s32.totalorder %s160, %s174
      %p176 = scmp.eq.s32.totalorder %s24, 0
      %p177 = por %p175, %p176
      %s179 = sadd.s32 %s178, 1
      %p182 = scmp.eq.s32.totalorder %s18, 1
      %p183 = scmp.ne.s32.totalorder %s178, %s180
      %p184 = scmp.eq.s32.totalorder %s18, 0
      %p185 = por %p183, %p184
      %p186 = scmp.ne.s32.totalorder %s178, %s180
      %p187 = scmp.eq.s32.totalorder %s23, 1
      %p188 = por %p186, %p187
      %p189 = scmp.ne.s32.totalorder %s180, %s181
      %p190 = scmp.eq.s32.totalorder %s23, 0
      %p191 = por %p189, %p190
      %p192 = scmp.ne.s32.totalorder %s180, %s181
      %p193 = scmp.eq.s32.totalorder %s24, 1
      %p194 = por %p192, %p193
      %p196 = scmp.ne.s32.totalorder %s181, %s195
      %p197 = scmp.eq.s32.totalorder %s24, 0
      %p198 = por %p196, %p197
      %s200 = sadd.s32 %s199, 1
      %p203 = scmp.eq.s32.totalorder %s18, 1
      %p204 = scmp.ne.s32.totalorder %s199, %s201
      %p205 = scmp.eq.s32.totalorder %s18, 0
      %p206 = por %p204, %p205
      %p207 = scmp.ne.s32.totalorder %s199, %s201
      %p208 = scmp.eq.s32.totalorder %s23, 1
      %p209 = por %p207, %p208
      %p210 = scmp.ne.s32.totalorder %s201, %s202
      %p211 = scmp.eq.s32.totalorder %s23, 0
      %p212 = por %p210, %p211
      %p213 = scmp.ne.s32.totalorder %s201, %s202
      %p214 = scmp.eq.s32.totalorder %s24, 1
      %p215 = por %p213, %p214
      %p217 = scmp.ne.s32.totalorder %s202, %s216
      %p218 = scmp.eq.s32.totalorder %s24, 0
      %p219 = por %p217, %p218
      %s220 = ssub.s32 %s18, %s25
      %p221 = scmp.eq.s32.totalorder %s220, 0
      %s223 = sadd.s32 %s222, 1
      %s224 = scalar_select %p221, %s222, %s223
      %p227 = pneg %p221
      %p228 = scmp.eq.s32.totalorder %s18, 1
      %p229 = por %p227, %p228
      %p230 = scmp.ne.s32.totalorder %s222, %s225
      %p231 = scmp.eq.s32.totalorder %s18, 0
      %p232 = por %p230, %p231
      %p233 = scmp.ne.s32.totalorder %s222, %s225
      %p234 = scmp.eq.s32.totalorder %s23, 1
      %p235 = por %p233, %p234
      %p236 = scmp.ne.s32.totalorder %s225, %s226
      %p237 = scmp.eq.s32.totalorder %s23, 0
      %p238 = por %p236, %p237
      %p239 = scmp.ne.s32.totalorder %s225, %s226
      %p240 = scmp.eq.s32.totalorder %s24, 1
      %p241 = por %p239, %p240
      %p243 = scmp.ne.s32.totalorder %s226, %s242
      %p244 = scmp.eq.s32.totalorder %s24, 0
      %p245 = por %p243, %p244
      %p246 = scmp.le.s32.totalorder 1, %s18
      %p247 = scmp.lt.s32.totalorder %s18, 3
      %p248 = pnand %p246, %p247
      %p249 = pneg %p248
      // Predicated region
      $region9: #{tpu_custom_call.1} parent=5 // pred_check
        _
      $region10: #{tpu_custom_call.1} parent=5 // pred_check_branch
        %251 = sbr.rel (%p248) target = $region12
      $region11: #{tpu_custom_call.1} parent=5 // pred_region
        %s252 = ssub.s32 %s18, 1
        // Predicated region
        $region13: #{tpu_custom_call.1} parent=11 // pred_check
          %p253 = pneg %p65
        $region14: #{tpu_custom_call.1} parent=11 // pred_check_branch
          %255 = sbr.rel (%p253) target = $region16
        $region15: #{tpu_custom_call.1} parent=11 // pred_region
          _
        $region16: #{tpu_custom_call.1} parent=11 // pred_fallthru
          _
        // Predicated region
        $region17: #{tpu_custom_call.1} parent=11 // pred_check
          %p256 = pneg %p86
        $region18: #{tpu_custom_call.1} parent=11 // pred_check_branch
          %258 = sbr.rel (%p256) target = $region20
        $region19: #{tpu_custom_call.1} parent=11 // pred_region
          _
        $region20: #{tpu_custom_call.1} parent=11 // pred_fallthru
          _
        // Predicated region
        $region21: #{tpu_custom_call.1} parent=11 // pred_check
          %p259 = pneg %p107
        $region22: #{tpu_custom_call.1} parent=11 // pred_check_branch
          %261 = sbr.rel (%p259) target = $region24
        $region23: #{tpu_custom_call.1} parent=11 // pred_region
          _
        $region24: #{tpu_custom_call.1} parent=11 // pred_fallthru
          _
        // Predicated region
        $region25: #{tpu_custom_call.1} parent=11 // pred_check
          %p262 = pneg %p128
        $region26: #{tpu_custom_call.1} parent=11 // pred_check_branch
          %264 = sbr.rel (%p262) target = $region28
        $region27: #{tpu_custom_call.1} parent=11 // pred_region
          _
        $region28: #{tpu_custom_call.1} parent=11 // pred_fallthru
          _
        // Predicated region
        $region29: #{tpu_custom_call.1} parent=11 // pred_check
          %p265 = pneg %p149
        $region30: #{tpu_custom_call.1} parent=11 // pred_check_branch
          %267 = sbr.rel (%p265) target = $region32
        $region31: #{tpu_custom_call.1} parent=11 // pred_region
          _
        $region32: #{tpu_custom_call.1} parent=11 // pred_fallthru
          _
        // Predicated region
        $region33: #{tpu_custom_call.1} parent=11 // pred_check
          %p268 = pneg %p170
        $region34: #{tpu_custom_call.1} parent=11 // pred_check_branch
          %270 = sbr.rel (%p268) target = $region36
        $region35: #{tpu_custom_call.1} parent=11 // pred_region
          _
        $region36: #{tpu_custom_call.1} parent=11 // pred_fallthru
          _
        // Predicated region
        $region37: #{tpu_custom_call.1} parent=11 // pred_check
          %p271 = pneg %p191
        $region38: #{tpu_custom_call.1} parent=11 // pred_check_branch
          %273 = sbr.rel (%p271) target = $region40
        $region39: #{tpu_custom_call.1} parent=11 // pred_region
          _
        $region40: #{tpu_custom_call.1} parent=11 // pred_fallthru
          _
        // Predicated region
        $region41: #{tpu_custom_call.1} parent=11 // pred_check
          %p274 = pneg %p212
        $region42: #{tpu_custom_call.1} parent=11 // pred_check_branch
          %276 = sbr.rel (%p274) target = $region44
        $region43: #{tpu_custom_call.1} parent=11 // pred_region
          _
        $region44: #{tpu_custom_call.1} parent=11 // pred_fallthru
          _
      $region12: #{tpu_custom_call.1} parent=5 // pred_fallthru
        _
      %p277 = scmp.lt.s32.totalorder %s18, 2
      // Predicated region
      $region45: #{tpu_custom_call.1} parent=5 // pred_check
        %p278 = pneg %p277
      $region46: #{tpu_custom_call.1} parent=5 // pred_check_branch
        %280 = sbr.rel (%p278) target = $region48
      $region47: #{tpu_custom_call.1} parent=5 // pred_region
        // Predicated region
        $region49: #{tpu_custom_call.1} parent=47 // pred_check
          %p281 = pneg %p38
        $region50: #{tpu_custom_call.1} parent=47 // pred_check_branch
          %283 = sbr.rel (%p281) target = $region52
        $region51: #{tpu_custom_call.1} parent=47 // pred_region
          %p284 = scmp.lt.s32.totalorder %s18, 1
          %s285 = scalar_select %p284, %s18, 1
          %s286 = smul.addr %s285, 4
          %s287 = smul.addr %s286, 8
          %s288 = scalar_lea.vmem %s0, %s287
        $region52: #{tpu_custom_call.1} parent=47 // pred_fallthru
          _
      $region48: #{tpu_custom_call.1} parent=5 // pred_fallthru
        _
      %p289 = scmp.le.s32.totalorder 1, %s18
      %p290 = scmp.lt.s32.totalorder %s18, 3
      %p291 = pnand %p289, %p290
      %p292 = pneg %p291
      // Predicated region
      $region53: #{tpu_custom_call.1} parent=5 // pred_check
        _
      $region54: #{tpu_custom_call.1} parent=5 // pred_check_branch
        %294 = sbr.rel (%p291) target = $region56
      $region55: #{tpu_custom_call.1} parent=5 // pred_region
        %s295 = ssub.s32 %s18, 1
        %p296 = scmp.lt.s32.totalorder %s23, 1
        %s297 = scalar_select %p296, %s23, 1
        %s298 = smul.addr %s297, 4
        %s299 = smul.addr %s298, 8
        %s300 = scalar_lea.vmem %s0, %s299
        %p301 = pneg %p44
        %p302 = pneg %p41
        %p303 = pneg %p65
        %p304 = pneg %p62
        %p305 = pneg %p86
        %p306 = pneg %p83
        %p307 = pneg %p107
        %p308 = pneg %p104
        %p309 = pneg %p128
        %p310 = pneg %p125
        %p311 = pneg %p149
        %p312 = pneg %p146
        %p313 = pneg %p170
        %p314 = pneg %p167
        %p315 = pneg %p191
        %p316 = pneg %p188
        %p317 = pneg %p212
        %p318 = pneg %p209
        %p319 = pneg %p238
        %p320 = pneg %p235
        %s321 = sand.u32 %s225, 1
        %s322 = scalar_lea.sflag [#allocation3], %s321
        %s323 = sand.u32 %s225, 1
        %s324 = smul.addr %s323, 8
        %s325 = scalar_lea.vmem [#allocation2], %s324
        %p326 = scmp.lt.s32.totalorder %s23, 1
        %s327 = scalar_select %p326, %s23, 1
        %s328 = smul.addr %s327, 4
        %s329 = smul.addr %s328, 8
        %s330 = scalar_lea.vmem %s0, %s329
        %v331 = vld [vmem:[%s330] sm:$0xff]
        %v332 = vld [vmem:[%s330 + $0x8] sm:$0xff]
        %v333 = vld [vmem:[%s330 + $0x10] sm:$0xff]
        %v334 = vld [vmem:[%s330 + $0x18] sm:$0xff]
        %v335 = vld [vmem:[%s1] sm:$0xff]
        %v336 = vld [vmem:[%s1 + $0x8] sm:$0xff]
        %v337 = vld [vmem:[%s1 + $0x10] sm:$0xff]
        %v338 = vld [vmem:[%s1 + $0x18] sm:$0xff]
        %v339 = vld [vmem:[%s1 + $0x20] sm:$0xff]
        %v340 = vld [vmem:[%s1 + $0x28] sm:$0xff]
        %v341 = vld [vmem:[%s1 + $0x30] sm:$0xff]
        %v342 = vld [vmem:[%s1 + $0x38] sm:$0xff]
        %v343 = vld [vmem:[%s1 + $0x40] sm:$0xff]
        %v344 = vld [vmem:[%s1 + $0x48] sm:$0xff]
        %v345 = vld [vmem:[%s1 + $0x50] sm:$0xff]
        %v346 = vld [vmem:[%s1 + $0x58] sm:$0xff]
        %v347 = vld [vmem:[%s2] sm:$0xff]
        %v348 = vld [vmem:[%s2 + $0x8] sm:$0xff]
        %v349 = vld [vmem:[%s2 + $0x10] sm:$0xff]
        %v350 = vld [vmem:[%s2 + $0x18] sm:$0xff]
        %v351 = vld [vmem:[%s2 + $0x20] sm:$0xff]
        %v352 = vld [vmem:[%s2 + $0x28] sm:$0xff]
        %v353 = vld [vmem:[%s2 + $0x30] sm:$0xff]
        %v354 = vld [vmem:[%s2 + $0x38] sm:$0xff]
        %v355 = vld [vmem:[%s2 + $0x40] sm:$0xff]
        %v356 = vld [vmem:[%s2 + $0x48] sm:$0xff]
        %v357 = vld [vmem:[%s2 + $0x50] sm:$0xff]
        %v358 = vld [vmem:[%s2 + $0x58] sm:$0xff]
        %360 = vset.pattern.permute.xlu0 0
        %361 = vperm.xlu0 %360, %v347
        %v362 = vpop.permute.xlu0 %361
        %365 = vset.pattern.permute.xlu0 0
        %366 = vperm.xlu0 %365, %v348
        %v367 = vpop.permute.xlu0 %366
        %370 = vset.pattern.permute.xlu0 0
        %371 = vperm.xlu0 %370, %v349
        %v372 = vpop.permute.xlu0 %371
        %375 = vset.pattern.permute.xlu0 0
        %376 = vperm.xlu0 %375, %v350
        %v377 = vpop.permute.xlu0 %376
        %380 = vset.pattern.permute.xlu0 0
        %381 = vperm.xlu0 %380, %v351
        %v382 = vpop.permute.xlu0 %381
        %385 = vset.pattern.permute.xlu0 0
        %386 = vperm.xlu0 %385, %v352
        %v387 = vpop.permute.xlu0 %386
        %390 = vset.pattern.permute.xlu0 0
        %391 = vperm.xlu0 %390, %v353
        %v392 = vpop.permute.xlu0 %391
        %395 = vset.pattern.permute.xlu0 0
        %396 = vperm.xlu0 %395, %v354
        %v397 = vpop.permute.xlu0 %396
        %400 = vset.pattern.permute.xlu0 0
        %401 = vperm.xlu0 %400, %v355
        %v402 = vpop.permute.xlu0 %401
        %405 = vset.pattern.permute.xlu0 0
        %406 = vperm.xlu0 %405, %v356
        %v407 = vpop.permute.xlu0 %406
        %410 = vset.pattern.permute.xlu0 0
        %411 = vperm.xlu0 %410, %v357
        %v412 = vpop.permute.xlu0 %411
        %415 = vset.pattern.permute.xlu0 0
        %416 = vperm.xlu0 %415, %v358
        %v417 = vpop.permute.xlu0 %416
        %vm419 = vcmask 261120
        %v421 = vsel %vm419, %v335, 0
        %v424 = vsel %vm419, %v336, 0
        %v427 = vsel %vm419, %v337, 0
        %v430 = vsel %vm419, %v338, 0
        %v433 = vsel %vm419, %v339, 0
        %v436 = vsel %vm419, %v340, 0
        %v439 = vsel %vm419, %v341, 0
        %v442 = vsel %vm419, %v342, 0
        %v445 = vsel %vm419, %v343, 0
        %v448 = vsel %vm419, %v344, 0
        %v451 = vsel %vm419, %v345, 0
        %v454 = vsel %vm419, %v346, 0
        %456 = vmatpush.msra.mxu0 0.0
        %457 = vmatpush.msra.mxu0 0.0
        %458 = vmatpush.msra.mxu0 0.0
        %459 = vmatpush.msra.mxu0 0.0
        %460 = vmatpush.msra.mxu0 0.0
        %461 = vmatpush.msra.mxu0 0.0
        %462 = vmatpush.msra.mxu0 0.0
        %463 = vmatpush.msra.mxu0 0.0
        %464 = vmatpush.msra.mxu0 0.0
        %465 = vmatpush.msra.mxu0 0.0
        %466 = vmatpush.msra.mxu0 0.0
        %467 = vmatpush.msra.mxu0 0.0
        %468 = vmatpush.msra.mxu0 %v334
        %469 = vmatpush.msra.mxu0 %v333
        %470 = vmatpush.msra.mxu0 %v332
        %471 = vmatpush.msra.mxu0 %v331
        %472 = vmatmul.f32.gmra.mxu0 %v421
        %v473 = vpop.f32.mrf.mxu0
        %v474 = vadd.f32 %v362, %v473
        %475 = vmatmul.f32.gmra.mxu0 %v424
        %v476 = vpop.f32.mrf.mxu0
        %v477 = vadd.f32 %v367, %v476
        %478 = vmatmul.f32.gmra.mxu0 %v427
        %v479 = vpop.f32.mrf.mxu0
        %v480 = vadd.f32 %v372, %v479
        %481 = vmatmul.f32.gmra.mxu0 %v430
        %v482 = vpop.f32.mrf.mxu0
        %v483 = vadd.f32 %v377, %v482
        %484 = vmatmul.f32.gmra.mxu0 %v433
        %v485 = vpop.f32.mrf.mxu0
        %v486 = vadd.f32 %v382, %v485
        %487 = vmatmul.f32.gmra.mxu0 %v436
        %v488 = vpop.f32.mrf.mxu0
        %v489 = vadd.f32 %v387, %v488
        %490 = vmatmul.f32.gmra.mxu0 %v439
        %v491 = vpop.f32.mrf.mxu0
        %v492 = vadd.f32 %v392, %v491
        %493 = vmatmul.f32.gmra.mxu0 %v442
        %v494 = vpop.f32.mrf.mxu0
        %v495 = vadd.f32 %v397, %v494
        %496 = vmatmul.f32.gmra.mxu0 %v445
        %v497 = vpop.f32.mrf.mxu0
        %v498 = vadd.f32 %v402, %v497
        %499 = vmatmul.f32.gmra.mxu0 %v448
        %v500 = vpop.f32.mrf.mxu0
        %v501 = vadd.f32 %v407, %v500
        %502 = vmatmul.f32.gmra.mxu0 %v451
        %v503 = vpop.f32.mrf.mxu0
        %v504 = vadd.f32 %v412, %v503
        %505 = vmatmul.f32.gmra.mxu0 %v454
        %v506 = vpop.f32.mrf.mxu0
        %v507 = vadd.f32 %v417, %v506
        %508 = vdwg.mxu0
        %509 = vxpose.xlu0.b32.start [1/16] %v486, 128
        %510 = vxpose.xlu0.b32.cont [2/16] %v489, 128
        %511 = vxpose.xlu0.b32.cont [3/16] %v492, 128
        %512 = vxpose.xlu0.b32.cont [4/16] %v495, 128
        %513 = vxpose.xlu0.b32.cont [5/16] 0.0, 128
        %514 = vxpose.xlu0.b32.cont [6/16] 0.0, 128
        %515 = vxpose.xlu0.b32.cont [7/16] 0.0, 128
        %516 = vxpose.xlu0.b32.cont [8/16] 0.0, 128
        %517 = vxpose.xlu0.b32.cont [9/16] 0.0, 128
        %518 = vxpose.xlu0.b32.cont [10/16] 0.0, 128
        %519 = vxpose.xlu0.b32.cont [11/16] 0.0, 128
        %520 = vxpose.xlu0.b32.cont [12/16] 0.0, 128
        %521 = vxpose.xlu0.b32.cont [13/16] 0.0, 128
        %522 = vxpose.xlu0.b32.cont [14/16] 0.0, 128
        %523 = vxpose.xlu0.b32.cont [15/16] 0.0, 128
        %524 = vxpose.xlu0.b32.end [16/16] 0.0, 128
        %v525 = vpop.trf.xlu0
        %v526 = vpop.trf.xlu0
        %v527 = vpop.trf.xlu0
        %v528 = vpop.trf.xlu0
        %v529 = vpop.trf.xlu0
        %v530 = vpop.trf.xlu0
        %v531 = vpop.trf.xlu0
        %v532 = vpop.trf.xlu0
        %v533 = vpop.trf.xlu0
        %v534 = vpop.trf.xlu0
        %v535 = vpop.trf.xlu0
        %v536 = vpop.trf.xlu0
        %v537 = vpop.trf.xlu0
        %v538 = vpop.trf.xlu0
        %v539 = vpop.trf.xlu0
        %v540 = vpop.trf.xlu0
        %vm541 = vcmask 64512
        %v543 = vsel %vm541, %v525, 0
        %v546 = vsel %vm541, %v526, 0
        %v549 = vsel %vm541, %v527, 0
        %v552 = vsel %vm541, %v528, 0
        %554 = vmatpush.msra.mxu0 0.0
        %555 = vmatpush.msra.mxu0 0.0
        %556 = vmatpush.msra.mxu0 0.0
        %557 = vmatpush.msra.mxu0 0.0
        %558 = vmatpush.msra.mxu0 0.0
        %559 = vmatpush.msra.mxu0 0.0
        %560 = vmatpush.msra.mxu0 0.0
        %561 = vmatpush.msra.mxu0 0.0
        %562 = vmatpush.msra.mxu0 0.0
        %563 = vmatpush.msra.mxu0 0.0
        %564 = vmatpush.msra.mxu0 0.0
        %565 = vmatpush.msra.mxu0 0.0
        %566 = vmatpush.msra.mxu0 0.0
        %567 = vmatpush.msra.mxu0 0.0
        %568 = vmatpush.msra.mxu0 0.0
        %569 = vmatpush.msra.mxu0 %v474
        %570 = vmatmul.f32.gmra.mxu0 %v543
        %v571 = vpop.f32.mrf.mxu0
        %v572 = vadd.f32 0.0, %v571
        %573 = vmatmul.f32.gmra.mxu0 %v546
        %v574 = vpop.f32.mrf.mxu0
        %v575 = vadd.f32 0.0, %v574
        %576 = vmatmul.f32.gmra.mxu0 %v549
        %v577 = vpop.f32.mrf.mxu0
        %v578 = vadd.f32 0.0, %v577
        %579 = vmatmul.f32.gmra.mxu0 %v552
        %v580 = vpop.f32.mrf.mxu0
        %v581 = vadd.f32 0.0, %v580
        %582 = vdwg.mxu0
        %v583 = vsel %vm419, %v572, -inf
        %v584 = vsel %vm419, %v575, -inf
        %v585 = vsel %vm419, %v578, -inf
        %v586 = vsel %vm419, %v581, -inf
        %v587 = vmax.f32 %v583, %v584
        %v588 = vmax.f32 %v585, %v586
        %v589 = vmax.f32 %v587, %v588
        %v590 = vrot.slane %v589, 4
        %v591 = vmax.f32 %v589, %v590
        %v592 = vrot.slane %v591, 2
        %v593 = vmax.f32 %v591, %v592
        %v594 = vrot.slane %v593, 1
        %v595 = vmax.f32 %v593, %v594
        %v596 = vsub.f32 %v572, %v595
        %v597 = vsub.f32 %v575, %v595
        %v598 = vsub.f32 %v578, %v595
        %v599 = vsub.f32 %v581, %v595
        %v600 = vmul.f32 %v596, 1.442695
        %v601 = vpow.pop %v600
        %v602 = vmul.f32 %v597, 1.442695
        %v603 = vpow.pop %v602
        %v604 = vmul.f32 %v598, 1.442695
        %v605 = vpow.pop %v604
        %v606 = vmul.f32 %v599, 1.442695
        %v607 = vpow.pop %v606
        %v608 = vsel %vm419, %v601, 0.0
        %v609 = vsel %vm419, %v603, 0.0
        %v610 = vadd.f32 %v608, %v609
        %v611 = vsel %vm419, %v605, 0.0
        %v612 = vadd.f32 %v610, %v611
        %v613 = vsel %vm419, %v607, 0.0
        %v614 = vadd.f32 %v612, %v613
        %v615 = vrot.slane %v614, 4
        %v616 = vadd.f32 %v614, %v615
        %v617 = vrot.slane %v616, 2
        %v618 = vadd.f32 %v616, %v617
        %v619 = vrot.slane %v618, 1
        %v620 = vadd.f32 %v618, %v619
        %v621 = vrcp.pop %v620
        %v622 = vmul.f32 %v620, %v621
        %v623 = vsub.f32 1.0, %v622
        %v624 = vmul.f32 %v621, %v623
        %v625 = vadd.f32 %v621, %v624
        %vm626 = vweird.f32 %v620
        %vm627 = vweird.f32 %v621
        %vm628 = vmor %vm626, %vm627
        %v629 = vsel %vm628, %v621, %v625
        %v630 = vand.u32 2147483647, %v620
        %vm631 = vcmp.eq.f32.partialorder %v630, 8.507059e+37
        %v632 = vand.u32 %v620, 2147483648
        %v633 = vor.u32 1.1754944e-38, %v632
        %v634 = vsel %vm631, %v633, %v629
        %v635 = vmul.f32 %v601, %v634
        %v636 = vmul.f32 %v603, %v634
        %v637 = vmul.f32 %v605, %v634
        %v638 = vmul.f32 %v607, %v634
        %v640 = vsel %vm419, %v498, 0
        %642 = vmatpush.msra.mxu0 0.0
        %643 = vmatpush.msra.mxu0 0.0
        %644 = vmatpush.msra.mxu0 0.0
        %645 = vmatpush.msra.mxu0 0.0
        %646 = vmatpush.msra.mxu0 0.0
        %647 = vmatpush.msra.mxu0 0.0
        %648 = vmatpush.msra.mxu0 0.0
        %649 = vmatpush.msra.mxu0 0.0
        %650 = vmatpush.msra.mxu0 0.0
        %651 = vmatpush.msra.mxu0 0.0
        %652 = vmatpush.msra.mxu0 0.0
        %653 = vmatpush.msra.mxu0 0.0
        %654 = vmatpush.msra.mxu0 %v638
        %655 = vmatpush.msra.mxu0 %v637
        %656 = vmatpush.msra.mxu0 %v636
        %657 = vmatpush.msra.mxu0 %v635
        %658 = vmatmul.f32.gmra.mxu0 %v640
        %v659 = vpop.f32.mrf.mxu0
        %v660 = vadd.f32 0.0, %v659
        %661 = vdwg.mxu0
        %662 = vrot.lane.b32.xlu0 %v525, 120
        %v663 = vpop.permute.xlu0 %662
        %664 = vrot.lane.b32.xlu0 %v526, 120
        %v665 = vpop.permute.xlu0 %664
        %666 = vrot.lane.b32.xlu0 %v527, 120
        %v667 = vpop.permute.xlu0 %666
        %668 = vrot.lane.b32.xlu0 %v528, 120
        %v669 = vpop.permute.xlu0 %668
        %v670 = vsel %vm541, %v663, 0
        %v672 = vsel %vm541, %v665, 0
        %v674 = vsel %vm541, %v667, 0
        %v676 = vsel %vm541, %v669, 0
        %678 = vmatpush.msra.mxu0 0.0
        %679 = vmatpush.msra.mxu0 0.0
        %680 = vmatpush.msra.mxu0 0.0
        %681 = vmatpush.msra.mxu0 0.0
        %682 = vmatpush.msra.mxu0 0.0
        %683 = vmatpush.msra.mxu0 0.0
        %684 = vmatpush.msra.mxu0 0.0
        %685 = vmatpush.msra.mxu0 0.0
        %686 = vmatpush.msra.mxu0 0.0
        %687 = vmatpush.msra.mxu0 0.0
        %688 = vmatpush.msra.mxu0 0.0
        %689 = vmatpush.msra.mxu0 0.0
        %690 = vmatpush.msra.mxu0 0.0
        %691 = vmatpush.msra.mxu0 0.0
        %692 = vmatpush.msra.mxu0 0.0
        %693 = vmatpush.msra.mxu0 %v477
        %694 = vmatmul.f32.gmra.mxu0 %v670
        %v695 = vpop.f32.mrf.mxu0
        %v696 = vadd.f32 0.0, %v695
        %697 = vmatmul.f32.gmra.mxu0 %v672
        %v698 = vpop.f32.mrf.mxu0
        %v699 = vadd.f32 0.0, %v698
        %700 = vmatmul.f32.gmra.mxu0 %v674
        %v701 = vpop.f32.mrf.mxu0
        %v702 = vadd.f32 0.0, %v701
        %703 = vmatmul.f32.gmra.mxu0 %v676
        %v704 = vpop.f32.mrf.mxu0
        %v705 = vadd.f32 0.0, %v704
        %706 = vdwg.mxu0
        %v707 = vsel %vm419, %v696, -inf
        %v708 = vsel %vm419, %v699, -inf
        %v709 = vsel %vm419, %v702, -inf
        %v710 = vsel %vm419, %v705, -inf
        %v711 = vmax.f32 %v707, %v708
        %v712 = vmax.f32 %v709, %v710
        %v713 = vmax.f32 %v711, %v712
        %v714 = vrot.slane %v713, 4
        %v715 = vmax.f32 %v713, %v714
        %v716 = vrot.slane %v715, 2
        %v717 = vmax.f32 %v715, %v716
        %v718 = vrot.slane %v717, 1
        %v719 = vmax.f32 %v717, %v718
        %v720 = vsub.f32 %v696, %v719
        %v721 = vsub.f32 %v699, %v719
        %v722 = vsub.f32 %v702, %v719
        %v723 = vsub.f32 %v705, %v719
        %v724 = vmul.f32 %v720, 1.442695
        %v725 = vpow.pop %v724
        %v726 = vmul.f32 %v721, 1.442695
        %v727 = vpow.pop %v726
        %v728 = vmul.f32 %v722, 1.442695
        %v729 = vpow.pop %v728
        %v730 = vmul.f32 %v723, 1.442695
        %v731 = vpow.pop %v730
        %v732 = vsel %vm419, %v725, 0.0
        %v733 = vsel %vm419, %v727, 0.0
        %v734 = vadd.f32 %v732, %v733
        %v735 = vsel %vm419, %v729, 0.0
        %v736 = vadd.f32 %v734, %v735
        %v737 = vsel %vm419, %v731, 0.0
        %v738 = vadd.f32 %v736, %v737
        %v739 = vrot.slane %v738, 4
        %v740 = vadd.f32 %v738, %v739
        %v741 = vrot.slane %v740, 2
        %v742 = vadd.f32 %v740, %v741
        %v743 = vrot.slane %v742, 1
        %v744 = vadd.f32 %v742, %v743
        %v745 = vrcp.pop %v744
        %v746 = vmul.f32 %v744, %v745
        %v747 = vsub.f32 1.0, %v746
        %v748 = vmul.f32 %v745, %v747
        %v749 = vadd.f32 %v745, %v748
        %vm750 = vweird.f32 %v744
        %vm751 = vweird.f32 %v745
        %vm752 = vmor %vm750, %vm751
        %v753 = vsel %vm752, %v745, %v749
        %v754 = vand.u32 2147483647, %v744
        %vm755 = vcmp.eq.f32.partialorder %v754, 8.507059e+37
        %v756 = vand.u32 %v744, 2147483648
        %v757 = vor.u32 1.1754944e-38, %v756
        %v758 = vsel %vm755, %v757, %v753
        %v759 = vmul.f32 %v725, %v758
        %v760 = vmul.f32 %v727, %v758
        %v761 = vmul.f32 %v729, %v758
        %v762 = vmul.f32 %v731, %v758
        %v764 = vsel %vm419, %v501, 0
        %766 = vmatpush.msra.mxu0 0.0
        %767 = vmatpush.msra.mxu0 0.0
        %768 = vmatpush.msra.mxu0 0.0
        %769 = vmatpush.msra.mxu0 0.0
        %770 = vmatpush.msra.mxu0 0.0
        %771 = vmatpush.msra.mxu0 0.0
        %772 = vmatpush.msra.mxu0 0.0
        %773 = vmatpush.msra.mxu0 0.0
        %774 = vmatpush.msra.mxu0 0.0
        %775 = vmatpush.msra.mxu0 0.0
        %776 = vmatpush.msra.mxu0 0.0
        %777 = vmatpush.msra.mxu0 0.0
        %778 = vmatpush.msra.mxu0 %v762
        %779 = vmatpush.msra.mxu0 %v761
        %780 = vmatpush.msra.mxu0 %v760
        %781 = vmatpush.msra.mxu0 %v759
        %782 = vmatmul.f32.gmra.mxu0 %v764
        %v783 = vpop.f32.mrf.mxu0
        %v784 = vadd.f32 0.0, %v783
        %785 = vdwg.mxu0
        %786 = vrot.lane.b32.xlu0 %v525, 112
        %v787 = vpop.permute.xlu0 %786
        %788 = vrot.lane.b32.xlu0 %v526, 112
        %v789 = vpop.permute.xlu0 %788
        %790 = vrot.lane.b32.xlu0 %v527, 112
        %v791 = vpop.permute.xlu0 %790
        %792 = vrot.lane.b32.xlu0 %v528, 112
        %v793 = vpop.permute.xlu0 %792
        %v794 = vsel %vm541, %v787, 0
        %v796 = vsel %vm541, %v789, 0
        %v798 = vsel %vm541, %v791, 0
        %v800 = vsel %vm541, %v793, 0
        %802 = vmatpush.msra.mxu0 0.0
        %803 = vmatpush.msra.mxu0 0.0
        %804 = vmatpush.msra.mxu0 0.0
        %805 = vmatpush.msra.mxu0 0.0
        %806 = vmatpush.msra.mxu0 0.0
        %807 = vmatpush.msra.mxu0 0.0
        %808 = vmatpush.msra.mxu0 0.0
        %809 = vmatpush.msra.mxu0 0.0
        %810 = vmatpush.msra.mxu0 0.0
        %811 = vmatpush.msra.mxu0 0.0
        %812 = vmatpush.msra.mxu0 0.0
        %813 = vmatpush.msra.mxu0 0.0
        %814 = vmatpush.msra.mxu0 0.0
        %815 = vmatpush.msra.mxu0 0.0
        %816 = vmatpush.msra.mxu0 0.0
        %817 = vmatpush.msra.mxu0 %v480
        %818 = vmatmul.f32.gmra.mxu0 %v794
        %v819 = vpop.f32.mrf.mxu0
        %v820 = vadd.f32 0.0, %v819
        %821 = vmatmul.f32.gmra.mxu0 %v796
        %v822 = vpop.f32.mrf.mxu0
        %v823 = vadd.f32 0.0, %v822
        %824 = vmatmul.f32.gmra.mxu0 %v798
        %v825 = vpop.f32.mrf.mxu0
        %v826 = vadd.f32 0.0, %v825
        %827 = vmatmul.f32.gmra.mxu0 %v800
        %v828 = vpop.f32.mrf.mxu0
        %v829 = vadd.f32 0.0, %v828
        %830 = vdwg.mxu0
        %v831 = vsel %vm419, %v820, -inf
        %v832 = vsel %vm419, %v823, -inf
        %v833 = vsel %vm419, %v826, -inf
        %v834 = vsel %vm419, %v829, -inf
        %v835 = vmax.f32 %v831, %v832
        %v836 = vmax.f32 %v833, %v834
        %v837 = vmax.f32 %v835, %v836
        %v838 = vrot.slane %v837, 4
        %v839 = vmax.f32 %v837, %v838
        %v840 = vrot.slane %v839, 2
        %v841 = vmax.f32 %v839, %v840
        %v842 = vrot.slane %v841, 1
        %v843 = vmax.f32 %v841, %v842
        %v844 = vsub.f32 %v820, %v843
        %v845 = vsub.f32 %v823, %v843
        %v846 = vsub.f32 %v826, %v843
        %v847 = vsub.f32 %v829, %v843
        %v848 = vmul.f32 %v844, 1.442695
        %v849 = vpow.pop %v848
        %v850 = vmul.f32 %v845, 1.442695
        %v851 = vpow.pop %v850
        %v852 = vmul.f32 %v846, 1.442695
        %v853 = vpow.pop %v852
        %v854 = vmul.f32 %v847, 1.442695
        %v855 = vpow.pop %v854
        %v856 = vsel %vm419, %v849, 0.0
        %v857 = vsel %vm419, %v851, 0.0
        %v858 = vadd.f32 %v856, %v857
        %v859 = vsel %vm419, %v853, 0.0
        %v860 = vadd.f32 %v858, %v859
        %v861 = vsel %vm419, %v855, 0.0
        %v862 = vadd.f32 %v860, %v861
        %v863 = vrot.slane %v862, 4
        %v864 = vadd.f32 %v862, %v863
        %v865 = vrot.slane %v864, 2
        %v866 = vadd.f32 %v864, %v865
        %v867 = vrot.slane %v866, 1
        %v868 = vadd.f32 %v866, %v867
        %v869 = vrcp.pop %v868
        %v870 = vmul.f32 %v868, %v869
        %v871 = vsub.f32 1.0, %v870
        %v872 = vmul.f32 %v869, %v871
        %v873 = vadd.f32 %v869, %v872
        %vm874 = vweird.f32 %v868
        %vm875 = vweird.f32 %v869
        %vm876 = vmor %vm874, %vm875
        %v877 = vsel %vm876, %v869, %v873
        %v878 = vand.u32 2147483647, %v868
        %vm879 = vcmp.eq.f32.partialorder %v878, 8.507059e+37
        %v880 = vand.u32 %v868, 2147483648
        %v881 = vor.u32 1.1754944e-38, %v880
        %v882 = vsel %vm879, %v881, %v877
        %v883 = vmul.f32 %v849, %v882
        %v884 = vmul.f32 %v851, %v882
        %v885 = vmul.f32 %v853, %v882
        %v886 = vmul.f32 %v855, %v882
        %v888 = vsel %vm419, %v504, 0
        %890 = vmatpush.msra.mxu0 0.0
        %891 = vmatpush.msra.mxu0 0.0
        %892 = vmatpush.msra.mxu0 0.0
        %893 = vmatpush.msra.mxu0 0.0
        %894 = vmatpush.msra.mxu0 0.0
        %895 = vmatpush.msra.mxu0 0.0
        %896 = vmatpush.msra.mxu0 0.0
        %897 = vmatpush.msra.mxu0 0.0
        %898 = vmatpush.msra.mxu0 0.0
        %899 = vmatpush.msra.mxu0 0.0
        %900 = vmatpush.msra.mxu0 0.0
        %901 = vmatpush.msra.mxu0 0.0
        %902 = vmatpush.msra.mxu0 %v886
        %903 = vmatpush.msra.mxu0 %v885
        %904 = vmatpush.msra.mxu0 %v884
        %905 = vmatpush.msra.mxu0 %v883
        %906 = vmatmul.f32.gmra.mxu0 %v888
        %v907 = vpop.f32.mrf.mxu0
        %v908 = vadd.f32 0.0, %v907
        %909 = vdwg.mxu0
        %910 = vrot.lane.b32.xlu0 %v525, 104
        %v911 = vpop.permute.xlu0 %910
        %912 = vrot.lane.b32.xlu0 %v526, 104
        %v913 = vpop.permute.xlu0 %912
        %914 = vrot.lane.b32.xlu0 %v527, 104
        %v915 = vpop.permute.xlu0 %914
        %916 = vrot.lane.b32.xlu0 %v528, 104
        %v917 = vpop.permute.xlu0 %916
        %v918 = vsel %vm541, %v911, 0
        %v920 = vsel %vm541, %v913, 0
        %v922 = vsel %vm541, %v915, 0
        %v924 = vsel %vm541, %v917, 0
        %926 = vmatpush.msra.mxu0 0.0
        %927 = vmatpush.msra.mxu0 0.0
        %928 = vmatpush.msra.mxu0 0.0
        %929 = vmatpush.msra.mxu0 0.0
        %930 = vmatpush.msra.mxu0 0.0
        %931 = vmatpush.msra.mxu0 0.0
        %932 = vmatpush.msra.mxu0 0.0
        %933 = vmatpush.msra.mxu0 0.0
        %934 = vmatpush.msra.mxu0 0.0
        %935 = vmatpush.msra.mxu0 0.0
        %936 = vmatpush.msra.mxu0 0.0
        %937 = vmatpush.msra.mxu0 0.0
        %938 = vmatpush.msra.mxu0 0.0
        %939 = vmatpush.msra.mxu0 0.0
        %940 = vmatpush.msra.mxu0 0.0
        %941 = vmatpush.msra.mxu0 %v483
        %942 = vmatmul.f32.gmra.mxu0 %v918
        %v943 = vpop.f32.mrf.mxu0
        %v944 = vadd.f32 0.0, %v943
        %945 = vmatmul.f32.gmra.mxu0 %v920
        %v946 = vpop.f32.mrf.mxu0
        %v947 = vadd.f32 0.0, %v946
        %948 = vmatmul.f32.gmra.mxu0 %v922
        %v949 = vpop.f32.mrf.mxu0
        %v950 = vadd.f32 0.0, %v949
        %951 = vmatmul.f32.gmra.mxu0 %v924
        %v952 = vpop.f32.mrf.mxu0
        %v953 = vadd.f32 0.0, %v952
        %954 = vdwg.mxu0
        %v955 = vsel %vm419, %v944, -inf
        %v956 = vsel %vm419, %v947, -inf
        %v957 = vsel %vm419, %v950, -inf
        %v958 = vsel %vm419, %v953, -inf
        %v959 = vmax.f32 %v955, %v956
        %v960 = vmax.f32 %v957, %v958
        %v961 = vmax.f32 %v959, %v960
        %v962 = vrot.slane %v961, 4
        %v963 = vmax.f32 %v961, %v962
        %v964 = vrot.slane %v963, 2
        %v965 = vmax.f32 %v963, %v964
        %v966 = vrot.slane %v965, 1
        %v967 = vmax.f32 %v965, %v966
        %v968 = vsub.f32 %v944, %v967
        %v969 = vsub.f32 %v947, %v967
        %v970 = vsub.f32 %v950, %v967
        %v971 = vsub.f32 %v953, %v967
        %v972 = vmul.f32 %v968, 1.442695
        %v973 = vpow.pop %v972
        %v974 = vmul.f32 %v969, 1.442695
        %v975 = vpow.pop %v974
        %v976 = vmul.f32 %v970, 1.442695
        %v977 = vpow.pop %v976
        %v978 = vmul.f32 %v971, 1.442695
        %v979 = vpow.pop %v978
        %v980 = vsel %vm419, %v973, 0.0
        %v981 = vsel %vm419, %v975, 0.0
        %v982 = vadd.f32 %v980, %v981
        %v983 = vsel %vm419, %v977, 0.0
        %v984 = vadd.f32 %v982, %v983
        %v985 = vsel %vm419, %v979, 0.0
        %v986 = vadd.f32 %v984, %v985
        %v987 = vrot.slane %v986, 4
        %v988 = vadd.f32 %v986, %v987
        %v989 = vrot.slane %v988, 2
        %v990 = vadd.f32 %v988, %v989
        %v991 = vrot.slane %v990, 1
        %v992 = vadd.f32 %v990, %v991
        %v993 = vrcp.pop %v992
        %v994 = vmul.f32 %v992, %v993
        %v995 = vsub.f32 1.0, %v994
        %v996 = vmul.f32 %v993, %v995
        %v997 = vadd.f32 %v993, %v996
        %vm998 = vweird.f32 %v992
        %vm999 = vweird.f32 %v993
        %vm1000 = vmor %vm998, %vm999
        %v1001 = vsel %vm1000, %v993, %v997
        %v1002 = vand.u32 2147483647, %v992
        %vm1003 = vcmp.eq.f32.partialorder %v1002, 8.507059e+37
        %v1004 = vand.u32 %v992, 2147483648
        %v1005 = vor.u32 1.1754944e-38, %v1004
        %v1006 = vsel %vm1003, %v1005, %v1001
        %v1007 = vmul.f32 %v973, %v1006
        %v1008 = vmul.f32 %v975, %v1006
        %v1009 = vmul.f32 %v977, %v1006
        %v1010 = vmul.f32 %v979, %v1006
        %v1012 = vsel %vm419, %v507, 0
        %1014 = vmatpush.msra.mxu0 0.0
        %1015 = vmatpush.msra.mxu0 0.0
        %1016 = vmatpush.msra.mxu0 0.0
        %1017 = vmatpush.msra.mxu0 0.0
        %1018 = vmatpush.msra.mxu0 0.0
        %1019 = vmatpush.msra.mxu0 0.0
        %1020 = vmatpush.msra.mxu0 0.0
        %1021 = vmatpush.msra.mxu0 0.0
        %1022 = vmatpush.msra.mxu0 0.0
        %1023 = vmatpush.msra.mxu0 0.0
        %1024 = vmatpush.msra.mxu0 0.0
        %1025 = vmatpush.msra.mxu0 0.0
        %1026 = vmatpush.msra.mxu0 %v1010
        %1027 = vmatpush.msra.mxu0 %v1009
        %1028 = vmatpush.msra.mxu0 %v1008
        %1029 = vmatpush.msra.mxu0 %v1007
        %1030 = vmatmul.f32.gmra.mxu0 %v1012
        %v1031 = vpop.f32.mrf.mxu0
        %v1032 = vadd.f32 0.0, %v1031
        %1033 = vdwg.mxu0
        %v1034 = vld [vmem:[%s3] sm:$0xff]
        %v1035 = vld [vmem:[%s3 + $0x8] sm:$0xff]
        %v1036 = vld [vmem:[%s3 + $0x10] sm:$0xff]
        %v1037 = vld [vmem:[%s3 + $0x18] sm:$0xff]
        %v1038 = vld [vmem:[%s4] sm:$0xff]
        %v1039 = vld [vmem:[%s4 + $0x8] sm:$0xff]
        %v1040 = vld [vmem:[%s4 + $0x10] sm:$0xff]
        %v1041 = vld [vmem:[%s4 + $0x18] sm:$0xff]
        %1043 = vset.pattern.permute.xlu0 0
        %1044 = vperm.xlu0 %1043, %v1038
        %v1045 = vpop.permute.xlu0 %1044
        %1048 = vset.pattern.permute.xlu0 0
        %1049 = vperm.xlu0 %1048, %v1039
        %v1050 = vpop.permute.xlu0 %1049
        %1053 = vset.pattern.permute.xlu0 0
        %1054 = vperm.xlu0 %1053, %v1040
        %v1055 = vpop.permute.xlu0 %1054
        %1058 = vset.pattern.permute.xlu0 0
        %1059 = vperm.xlu0 %1058, %v1041
        %v1060 = vpop.permute.xlu0 %1059
        %v1063 = vsel %vm419, %v1034, 0
        %v1066 = vsel %vm419, %v1035, 0
        %v1069 = vsel %vm419, %v1036, 0
        %v1072 = vsel %vm419, %v1037, 0
        %1074 = vmatpush.msra.mxu0 0.0
        %1075 = vmatpush.msra.mxu0 0.0
        %1076 = vmatpush.msra.mxu0 0.0
        %1077 = vmatpush.msra.mxu0 0.0
        %1078 = vmatpush.msra.mxu0 0.0
        %1079 = vmatpush.msra.mxu0 0.0
        %1080 = vmatpush.msra.mxu0 0.0
        %1081 = vmatpush.msra.mxu0 0.0
        %1082 = vmatpush.msra.mxu0 0.0
        %1083 = vmatpush.msra.mxu0 0.0
        %1084 = vmatpush.msra.mxu0 0.0
        %1085 = vmatpush.msra.mxu0 0.0
        %1086 = vmatpush.msra.mxu0 %v1032
        %1087 = vmatpush.msra.mxu0 %v908
        %1088 = vmatpush.msra.mxu0 %v784
        %1089 = vmatpush.msra.mxu0 %v660
        %1090 = vmatmul.f32.gmra.mxu0 %v1063
        %v1091 = vpop.f32.mrf.mxu0
        %v1092 = vadd.f32 %v1045, %v1091
        %1093 = vmatmul.f32.gmra.mxu0 %v1066
        %v1094 = vpop.f32.mrf.mxu0
        %v1095 = vadd.f32 %v1050, %v1094
        %1096 = vmatmul.f32.gmra.mxu0 %v1069
        %v1097 = vpop.f32.mrf.mxu0
        %v1098 = vadd.f32 %v1055, %v1097
        %1099 = vmatmul.f32.gmra.mxu0 %v1072
        %v1100 = vpop.f32.mrf.mxu0
        %v1101 = vadd.f32 %v1060, %v1100
        %1102 = vdwg.mxu0
        %v1103 = vadd.f32 %v331, %v1092
        %v1104 = vadd.f32 %v332, %v1095
        %v1105 = vadd.f32 %v333, %v1098
        %v1106 = vadd.f32 %v334, %v1101
        %v1107 = vsel %vm419, %v1103, 0.0
        %v1108 = vsel %vm419, %v1104, 0.0
        %v1109 = vadd.f32 %v1107, %v1108
        %v1110 = vsel %vm419, %v1105, 0.0
        %v1111 = vadd.f32 %v1109, %v1110
        %v1112 = vsel %vm419, %v1106, 0.0
        %v1113 = vadd.f32 %v1111, %v1112
        %1114 = vadd.xlane.f32.xlu0 %v1113
        %v1115 = vpop.xlane.xlu0 %1114
        %v1116 = vrot.slane %v1115, 4
        %v1117 = vadd.f32 %v1115, %v1116
        %v1118 = vrot.slane %v1117, 2
        %v1119 = vadd.f32 %v1117, %v1118
        %v1120 = vrot.slane %v1119, 1
        %v1121 = vadd.f32 %v1119, %v1120
        %s1122 = vtos %v1121
        %v1123 = vrcp.pop 1024.0
        %v1124 = vmul.f32 1024.0, %v1123
        %v1125 = vsub.f32 1.0, %v1124
        %v1126 = vmul.f32 %v1123, %v1125
        %v1127 = vadd.f32 %v1123, %v1126
        %vm1128 = vweird.f32 %v1123
        %v1129 = vsel %vm1128, %v1123, %v1127
        %s1130 = vtos %v1129
        %s1131 = smul.f32 %s1122, %s1130
        %v1132 = vstv %s1131
        %v1133 = vsub.f32 %v1103, %v1132
        %v1134 = vsub.f32 %v1104, %v1132
        %v1135 = vsub.f32 %v1105, %v1132
        %v1136 = vsub.f32 %v1106, %v1132
        %v1137 = vmul.f32 %v1133, %v1133
        %v1138 = vmul.f32 %v1134, %v1134
        %v1139 = vmul.f32 %v1135, %v1135
        %v1140 = vmul.f32 %v1136, %v1136
        %v1141 = vsel %vm419, %v1137, 0.0
        %v1142 = vsel %vm419, %v1138, 0.0
        %v1143 = vadd.f32 %v1141, %v1142
        %v1144 = vsel %vm419, %v1139, 0.0
        %v1145 = vadd.f32 %v1143, %v1144
        %v1146 = vsel %vm419, %v1140, 0.0
        %v1147 = vadd.f32 %v1145, %v1146
        %1148 = vadd.xlane.f32.xlu0 %v1147
        %v1149 = vpop.xlane.xlu0 %1148
        %v1150 = vrot.slane %v1149, 4
        %v1151 = vadd.f32 %v1149, %v1150
        %v1152 = vrot.slane %v1151, 2
        %v1153 = vadd.f32 %v1151, %v1152
        %v1154 = vrot.slane %v1153, 1
        %v1155 = vadd.f32 %v1153, %v1154
        %s1156 = vtos %v1155
        %v1157 = vrcp.pop 1024.0
        %v1158 = vmul.f32 1024.0, %v1157
        %v1159 = vsub.f32 1.0, %v1158
        %v1160 = vmul.f32 %v1157, %v1159
        %v1161 = vadd.f32 %v1157, %v1160
        %vm1162 = vweird.f32 %v1157
        %v1163 = vsel %vm1162, %v1157, %v1161
        %s1164 = vtos %v1163
        %s1165 = smul.f32 %s1156, %s1164
        %s1166 = sadd.f32 %s1165, 1e-06
        %v1167 = vstv %s1166
        %v1168 = vrsqrt.pop %v1167
        %v1169 = vmul.f32 %v1168, %v1167
        %v1170 = vmul.f32 %v1169, %v1168
        %v1171 = vmul.f32 0.5, %v1170
        %v1172 = vsub.f32 1.5, %v1171
        %v1173 = vmul.f32 %v1168, %v1172
        %vm1174 = vweird.f32 %v1167
        %vm1175 = vweird.f32 %v1168
        %vm1176 = vmor %vm1174, %vm1175
        %v1177 = vsel %vm1176, %v1168, %v1173
        %s1178 = vtos %v1177
        %v1179 = vstv %s1178
        %v1180 = vmul.f32 %v1133, %v1179
        %v1181 = vmul.f32 %v1134, %v1179
        %v1182 = vmul.f32 %v1135, %v1179
        %v1183 = vmul.f32 %v1136, %v1179
        %v1184 = vld [vmem:[%s5] sm:$0xff]
        %v1185 = vld [vmem:[%s5 + $0x8] sm:$0xff]
        %v1186 = vld [vmem:[%s5 + $0x10] sm:$0xff]
        %v1187 = vld [vmem:[%s5 + $0x18] sm:$0xff]
        %v1188 = vld [vmem:[%s6] sm:$0x1]
        %v1190 = vperm.slane %v1188, 0
        %v1193 = vsel %vm419, %v1180, 0
        %v1196 = vsel %vm419, %v1181, 0
        %v1199 = vsel %vm419, %v1182, 0
        %v1202 = vsel %vm419, %v1183, 0
        %1204 = vmatpush.msra.mxu0 0.0
        %1205 = vmatpush.msra.mxu0 0.0
        %1206 = vmatpush.msra.mxu0 0.0
        %1207 = vmatpush.msra.mxu0 0.0
        %1208 = vmatpush.msra.mxu0 0.0
        %1209 = vmatpush.msra.mxu0 0.0
        %1210 = vmatpush.msra.mxu0 0.0
        %1211 = vmatpush.msra.mxu0 0.0
        %1212 = vmatpush.msra.mxu0 0.0
        %1213 = vmatpush.msra.mxu0 0.0
        %1214 = vmatpush.msra.mxu0 0.0
        %1215 = vmatpush.msra.mxu0 0.0
        %1216 = vmatpush.msra.mxu0 %v1187
        %1217 = vmatpush.msra.mxu0 %v1186
        %1218 = vmatpush.msra.mxu0 %v1185
        %1219 = vmatpush.msra.mxu0 %v1184
        %1220 = vmatmul.f32.gmra.mxu0 %v1193
        %v1221 = vpop.f32.mrf.mxu0
        %v1222 = vadd.f32 %v1190, %v1221
        %1223 = vmatmul.f32.gmra.mxu0 %v1196
        %v1224 = vpop.f32.mrf.mxu0
        %v1225 = vadd.f32 %v1190, %v1224
        %1226 = vmatmul.f32.gmra.mxu0 %v1199
        %v1227 = vpop.f32.mrf.mxu0
        %v1228 = vadd.f32 %v1190, %v1227
        %1229 = vmatmul.f32.gmra.mxu0 %v1202
        %v1230 = vpop.f32.mrf.mxu0
        %v1231 = vadd.f32 %v1190, %v1230
        %1232 = vdwg.mxu0
        %v1233 = vmax.f32 %v1222, 0.0
        %v1234 = vmax.f32 %v1225, 0.0
        %v1235 = vmax.f32 %v1228, 0.0
        %v1236 = vmax.f32 %v1231, 0.0
        %v1237 = vld [vmem:[%s7] sm:$0xff]
        %v1238 = vld [vmem:[%s7 + $0x8] sm:$0xff]
        %v1239 = vld [vmem:[%s7 + $0x10] sm:$0xff]
        %v1240 = vld [vmem:[%s7 + $0x18] sm:$0xff]
        %v1241 = vld [vmem:[%s7 + $0x20] sm:$0xff]
        %v1242 = vld [vmem:[%s7 + $0x28] sm:$0xff]
        %v1243 = vld [vmem:[%s7 + $0x30] sm:$0xff]
        %v1244 = vld [vmem:[%s7 + $0x38] sm:$0xff]
        %v1245 = vld [vmem:[%s8] sm:$0x1]
        %v1247 = vperm.slane %v1245, 0
        %vm1249 = vcmask 523264
        %v1251 = vsel %vm1249, %v1233, 0
        %v1254 = vsel %vm1249, %v1234, 0
        %v1257 = vsel %vm1249, %v1235, 0
        %v1260 = vsel %vm1249, %v1236, 0
        %1262 = vmatpush.msra.mxu0 0.0
        %1263 = vmatpush.msra.mxu0 0.0
        %1264 = vmatpush.msra.mxu0 0.0
        %1265 = vmatpush.msra.mxu0 0.0
        %1266 = vmatpush.msra.mxu0 0.0
        %1267 = vmatpush.msra.mxu0 0.0
        %1268 = vmatpush.msra.mxu0 0.0
        %1269 = vmatpush.msra.mxu0 0.0
        %1270 = vmatpush.msra.mxu0 %v1244
        %1271 = vmatpush.msra.mxu0 %v1243
        %1272 = vmatpush.msra.mxu0 %v1242
        %1273 = vmatpush.msra.mxu0 %v1241
        %1274 = vmatpush.msra.mxu0 %v1240
        %1275 = vmatpush.msra.mxu0 %v1239
        %1276 = vmatpush.msra.mxu0 %v1238
        %1277 = vmatpush.msra.mxu0 %v1237
        %1278 = vmatmul.f32.gmra.mxu0 %v1251
        %v1279 = vpop.f32.mrf.mxu0
        %v1280 = vadd.f32 %v1247, %v1279
        %1281 = vmatmul.f32.gmra.mxu0 %v1254
        %v1282 = vpop.f32.mrf.mxu0
        %v1283 = vadd.f32 %v1247, %v1282
        %1284 = vmatmul.f32.gmra.mxu0 %v1257
        %v1285 = vpop.f32.mrf.mxu0
        %v1286 = vadd.f32 %v1247, %v1285
        %1287 = vmatmul.f32.gmra.mxu0 %v1260
        %v1288 = vpop.f32.mrf.mxu0
        %v1289 = vadd.f32 %v1247, %v1288
        %1290 = vdwg.mxu0
        %v1291 = vadd.f32 %v1180, %v1280
        %v1292 = vadd.f32 %v1181, %v1283
        %v1293 = vadd.f32 %v1182, %v1286
        %v1294 = vadd.f32 %v1183, %v1289
        %v1295 = vsel %vm419, %v1291, 0.0
        %v1296 = vsel %vm419, %v1292, 0.0
        %v1297 = vadd.f32 %v1295, %v1296
        %v1298 = vsel %vm419, %v1293, 0.0
        %v1299 = vadd.f32 %v1297, %v1298
        %v1300 = vsel %vm419, %v1294, 0.0
        %v1301 = vadd.f32 %v1299, %v1300
        %1302 = vadd.xlane.f32.xlu0 %v1301
        %v1303 = vpop.xlane.xlu0 %1302
        %v1304 = vrot.slane %v1303, 4
        %v1305 = vadd.f32 %v1303, %v1304
        %v1306 = vrot.slane %v1305, 2
        %v1307 = vadd.f32 %v1305, %v1306
        %v1308 = vrot.slane %v1307, 1
        %v1309 = vadd.f32 %v1307, %v1308
        %s1310 = vtos %v1309
        %v1311 = vrcp.pop 1024.0
        %v1312 = vmul.f32 1024.0, %v1311
        %v1313 = vsub.f32 1.0, %v1312
        %v1314 = vmul.f32 %v1311, %v1313
        %v1315 = vadd.f32 %v1311, %v1314
        %vm1316 = vweird.f32 %v1311
        %v1317 = vsel %vm1316, %v1311, %v1315
        %s1318 = vtos %v1317
        %s1319 = smul.f32 %s1310, %s1318
        %v1320 = vstv %s1319
        %v1321 = vsub.f32 %v1291, %v1320
        %v1322 = vsub.f32 %v1292, %v1320
        %v1323 = vsub.f32 %v1293, %v1320
        %v1324 = vsub.f32 %v1294, %v1320
        %v1325 = vmul.f32 %v1321, %v1321
        %v1326 = vmul.f32 %v1322, %v1322
        %v1327 = vmul.f32 %v1323, %v1323
        %v1328 = vmul.f32 %v1324, %v1324
        %v1329 = vsel %vm419, %v1325, 0.0
        %v1330 = vsel %vm419, %v1326, 0.0
        %v1331 = vadd.f32 %v1329, %v1330
        %v1332 = vsel %vm419, %v1327, 0.0
        %v1333 = vadd.f32 %v1331, %v1332
        %v1334 = vsel %vm419, %v1328, 0.0
        %v1335 = vadd.f32 %v1333, %v1334
        %1336 = vadd.xlane.f32.xlu0 %v1335
        %v1337 = vpop.xlane.xlu0 %1336
        %v1338 = vrot.slane %v1337, 4
        %v1339 = vadd.f32 %v1337, %v1338
        %v1340 = vrot.slane %v1339, 2
        %v1341 = vadd.f32 %v1339, %v1340
        %v1342 = vrot.slane %v1341, 1
        %v1343 = vadd.f32 %v1341, %v1342
        %s1344 = vtos %v1343
        %v1345 = vrcp.pop 1024.0
        %v1346 = vmul.f32 1024.0, %v1345
        %v1347 = vsub.f32 1.0, %v1346
        %v1348 = vmul.f32 %v1345, %v1347
        %v1349 = vadd.f32 %v1345, %v1348
        %vm1350 = vweird.f32 %v1345
        %v1351 = vsel %vm1350, %v1345, %v1349
        %s1352 = vtos %v1351
        %s1353 = smul.f32 %s1344, %s1352
        %s1354 = sadd.f32 %s1353, 1e-06
        %v1355 = vstv %s1354
        %v1356 = vrsqrt.pop %v1355
        %v1357 = vmul.f32 %v1356, %v1355
        %v1358 = vmul.f32 %v1357, %v1356
        %v1359 = vmul.f32 0.5, %v1358
        %v1360 = vsub.f32 1.5, %v1359
        %v1361 = vmul.f32 %v1356, %v1360
        %vm1362 = vweird.f32 %v1355
        %vm1363 = vweird.f32 %v1356
        %vm1364 = vmor %vm1362, %vm1363
        %v1365 = vsel %vm1364, %v1356, %v1361
        %s1366 = vtos %v1365
        %v1367 = vstv %s1366
        %v1368 = vmul.f32 %v1321, %v1367
        %v1369 = vmul.f32 %v1322, %v1367
        %v1370 = vmul.f32 %v1323, %v1367
        %v1371 = vmul.f32 %v1324, %v1367
        %1373 = vrot.lane.b32.xlu0 %v1369, 32
        %v1374 = vpop.permute.xlu0 %1373
        %1377 = vrot.lane.b32.xlu0 %v1370, 64
        %v1378 = vpop.permute.xlu0 %1377
        %1381 = vrot.lane.b32.xlu0 %v1371, 96
        %v1382 = vpop.permute.xlu0 %1381
        %v1384 = vsel %vm419, %v1368, %v1374
        %v1385 = vsel %vm1249, %v1384, %v1378
        %vm1386 = vcmask 785408
        %v1387 = vsel %vm1386, %v1385, %v1382
        %1388 = vst [vmem:[%s325] sm:$0xff] %v1387
        %s1389 = sand.u32 %s225, 1
        %s1390 = scalar_lea.sflag [#allocation3], %s1389
        %s1391 = sand.u32 %s225, 1
        %s1392 = smul.addr %s1391, 8
        %s1393 = scalar_lea.vmem [#allocation2], %s1392
        // Predicated region
        $region57: #{tpu_custom_call.1} parent=55 // pred_check
          %p1394 = pneg %p235
        $region58: #{tpu_custom_call.1} parent=55 // pred_check_branch
          %1396 = sbr.rel (%p1394) target = $region60
        $region59: #{tpu_custom_call.1} parent=55 // pred_region
          %1398 = vsyncadd %s1390, 0
          %s1399 = smul.addr %s23, 8
          %s1400 = scalar_lea.hbm %s9, %s1399
          %s1402 = sshll.u32 %s1393, 4
          %s1403 = int_to_ptr.vmem [resolvable:$true] %s1402
          %s1404 = sshll.u32 %s1400, 4
          %s1405 = int_to_ptr.hbm [resolvable:$true] %s1404
          %1407 = dma.vmem_to_hbm [thread:$0]  %s1403, 128, %s1405, %s1390
        $region60: #{tpu_custom_call.1} parent=55 // pred_fallthru
          _
      $region56: #{tpu_custom_call.1} parent=5 // pred_fallthru
        _
      %p1408 = scmp.le.s32.totalorder 2, %s18
      // Predicated region
      $region61: #{tpu_custom_call.1} parent=5 // pred_check
        %p1409 = pneg %p1408
      $region62: #{tpu_custom_call.1} parent=5 // pred_check_branch
        %1411 = sbr.rel (%p1409) target = $region64
      $region63: #{tpu_custom_call.1} parent=5 // pred_region
        %s1412 = ssub.s32 %s18, 2
        // Predicated region
        $region65: #{tpu_custom_call.1} parent=63 // pred_check
          %p1413 = pneg %p241
        $region66: #{tpu_custom_call.1} parent=63 // pred_check_branch
          %1415 = sbr.rel (%p1413) target = $region68
        $region67: #{tpu_custom_call.1} parent=63 // pred_region
          %s1416 = sand.u32 %s226, 1
          %s1417 = scalar_lea.sflag [#allocation3], %s1416
          %s1418 = sand.u32 %s226, 1
          %s1419 = smul.addr %s1418, 8
          %s1420 = scalar_lea.vmem [#allocation2], %s1419
          %1422 = dma.done %s1417, 128
        $region68: #{tpu_custom_call.1} parent=63 // pred_fallthru
          _
      $region64: #{tpu_custom_call.1} parent=5 // pred_fallthru
        _
    $region6: #{tpu_custom_call.1} parent=1 // loop_footer
      %s22 = sadd.s32 1, %s18
    $region7: #{tpu_custom_call.1} parent=1 // loop_footer_branch
      %17 = sbr.rel target = $region3
    $region8: #{tpu_custom_call.1} parent=1 // loop_exit
      _
    %1423 = vsyncpa [#allocation3], 1
    %s1424 = scalar_lea.sflag [#allocation3], 1
    %1425 = vsyncpa %s1424, 1

</llo_original>
